<compile_context>
chip_gen: v6e
topology: v6e:2x2x1
jax: 0.10.0
libtpu: 0.0.40
codegen_flags: <defaults>
</compile_context>

<pallas_src>
import functools

import jax
import jax.numpy as jnp
from jax.experimental import pallas as pl
from jax.experimental.pallas import tpu as pltpu


_MAX_UNROLL = 16                       # max samples statically unrolled per grid step
_HIGHEST = jax.lax.Precision.HIGHEST   # full-f32 MXU passes for the tiny gate math


# ----------------------------------------------------------------------------
# Hardware-aware sizing helpers
# ----------------------------------------------------------------------------
def _tpu_vmem_budget():
    """Return (physical_vmem_bytes, usable_bytes, two_tensorcores)."""
    try:
        cap = int(pltpu.get_tpu_info().vmem_capacity_bytes)
    except Exception:
        cap = 64 << 20                 # conservative fallback: v7x per-core VMEM
    usable = (cap * 3) // 4            # ~25% headroom for compiler scratch
    two_cores = cap <= (64 << 20)      # v7x: 64 MiB / TC and 2 TCs per chip
    return cap, usable, two_cores


def _pick_samples_per_block(batch, bb_max, two_cores):
    """Largest divisor of `batch` <= bb_max; on 2-TC chips prefer an even grid."""
    bb_max = max(1, min(bb_max, batch))
    divisors = [d for d in range(bb_max, 0, -1) if batch % d == 0]
    if two_cores and batch >= 2:
        for d in divisors:             # even grid keeps both TensorCores busy to the end
            if (batch // d) >= 2 and (batch // d) % 2 == 0:
                return d
        for d in divisors:
            if (batch // d) >= 2:
                return d
    return divisors[0]


# ----------------------------------------------------------------------------
# Kernels
# ----------------------------------------------------------------------------
def _se_fused_kernel(x_ref, w1_ref, b1_ref, w2_ref, b2_ref, o_ref, *, inv_hw):
    """Single-pass SE.  Block (Bb, C, HW), HW on lanes; gate kept in column layout."""
    bb, _, hw = x_ref.shape
    ones = jnp.ones((hw, 1), dtype=x_ref.dtype)          # hoisted out of the loop
    for s in range(bb):                                   # static unroll (bb <= _MAX_UNROLL)
        xs = x_ref[s]                                     # (C, HW)
        # Spatial mean as an MXU reduction: f32 accumulation, no f32 block copy.
        sums = jnp.dot(xs, ones, preferred_element_type=jnp.float32,
                       precision=_HIGHEST)                # (C, 1)
        avg = sums * inv_hw
        h = jnp.dot(w1_ref[...], avg, preferred_element_type=jnp.float32,
                    precision=_HIGHEST) + b1_ref[...]     # (hidden, 1)
        h = jnp.maximum(h, 0.0)
        y = jnp.dot(w2_ref[...], h, preferred_element_type=jnp.float32,
                    precision=_HIGHEST) + b2_ref[...]     # (C, 1)
        y = jax.nn.sigmoid(y)
        o_ref[s] = xs * y.astype(xs.dtype)                # lane-broadcast scale


def _se_fused_kernel_cl(x_ref, w1t_ref, b1_ref, w2t_ref, b2_ref, o_ref, *, inv_hw):
    """Single-pass SE, channels-last block (Bb, HW, C): small-HW maps, C on lanes."""
    bb = x_ref.shape[0]
    for s in range(bb):
        xs = x_ref[s]                                                    # (HW, C)
        avg = jnp.sum(xs.astype(jnp.float32), axis=0, keepdims=True) * inv_hw   # (1, C)
        h = jnp.dot(avg, w1t_ref[...], preferred_element_type=jnp.float32,
                    precision=_HIGHEST) + b1_ref[...]                    # (1, hidden)
        h = jnp.maximum(h, 0.0)
        y = jnp.dot(h, w2t_ref[...], preferred_element_type=jnp.float32,
                    precision=_HIGHEST) + b2_ref[...]                    # (1, C)
        y = jax.nn.sigmoid(y)
        o_ref[s] = xs * y.astype(xs.dtype)                               # sublane-broadcast


def _se_gate_kernel(x_ref, w1_ref, b1_ref, w2_ref, b2_ref, g_ref, acc_ref, *,
                    inv_hw, hw_total, needs_mask):
    """Two-pass, pass 1: accumulate per-channel spatial sums over HW tiles and,
    on the last tile, run the SE MLP and emit the sigmoid gate (C, 1)."""
    k = pl.program_id(1)

    @pl.when(k == 0)
    def _():
        acc_ref[...] = jnp.zeros_like(acc_ref)

    xs = x_ref[0]                                         # (C, thw)
    thw = xs.shape[1]
    if needs_mask:                                        # partial last HW tile
        lane = jax.lax.broadcasted_iota(jnp.int32, (1, thw), 1) + k * thw
        xs = jnp.where(lane < hw_total, xs, jnp.zeros_like(xs))
    ones = jnp.ones((thw, 1), dtype=xs.dtype)
    acc_ref[...] += jnp.dot(xs, ones, preferred_element_type=jnp.float32,
                            precision=_HIGHEST)           # (C, 1)

    @pl.when(k == pl.num_programs(1) - 1)
    def _():
        avg = acc_ref[...] * inv_hw
        h = jnp.maximum(jnp.dot(w1_ref[...], avg, preferred_element_type=jnp.float32,
                                precision=_HIGHEST) + b1_ref[...], 0.0)
        y = jax.nn.sigmoid(jnp.dot(w2_ref[...], h, preferred_element_type=jnp.float32,
                                   precision=_HIGHEST) + b2_ref[...])
        g_ref[0] = y                                      # (C, 1) f32 gate


def _se_scale_kernel(g_ref, x_ref, o_ref):
    """Two-pass, pass 2: lane-dense HW-tiled broadcast scale."""
    xs = x_ref[0]                                         # (C, thw)
    o_ref[0] = xs * g_ref[0].astype(xs.dtype)             # (C, 1) lane-broadcast


# ----------------------------------------------------------------------------
# Wrappers
# ----------------------------------------------------------------------------
def _se_fused(x3, w1, b1, w2, b2, *, inv_hw, vmem_usable, two_cores,
              bytes_per_sample, weight_bytes, donate):
    B, C, HW = x3.shape
    hidden = w1.shape[0]

    # Layout: HW on lanes unless the map is small (HW < 128) and C is lane-wide.
    channels_last = (HW < 128) and (C >= 128)
    if channels_last:
        xk = jnp.transpose(x3, (0, 2, 1))                 # (B, HW, C)
        kern = functools.partial(_se_fused_kernel_cl, inv_hw=inv_hw)
        w_args = (jnp.transpose(w1), b1.reshape(1, hidden),
                  jnp.transpose(w2), b2.reshape(1, C))
        w_specs = [pl.BlockSpec((C, hidden), lambda i: (0, 0)),
                   pl.BlockSpec((1, hidden), lambda i: (0, 0)),
                   pl.BlockSpec((hidden, C), lambda i: (0, 0)),
                   pl.BlockSpec((1, C), lambda i: (0, 0))]
        blk_tail = (HW, C)
    else:
        xk = x3                                           # (B, C, HW), HW on lanes
        kern = functools.partial(_se_fused_kernel, inv_hw=inv_hw)
        w_args = (w1, b1.reshape(hidden, 1), w2, b2.reshape(C, 1))
        w_specs = [pl.BlockSpec((hidden, C), lambda i: (0, 0)),
                   pl.BlockSpec((hidden, 1), lambda i: (0, 0)),
                   pl.BlockSpec((C, hidden), lambda i: (0, 0)),
                   pl.BlockSpec((C, 1), lambda i: (0, 0))]
        blk_tail = (C, HW)

    # Block sizing: ~8 MiB on 128 MiB-VMEM chips (v5e/v6e), ~4 MiB on v7x,
    # capped so double-buffered in + out blocks + weights fit the usable budget.
    target_block_bytes = (4 << 20) if two_cores else (8 << 20)
    target_block_bytes = min(target_block_bytes,
                             max(1 << 20, (vmem_usable - 2 * weight_bytes) // 5))
    bb = _pick_samples_per_block(
        B, min(_MAX_UNROLL, max(1, target_block_bytes // bytes_per_sample)),
        two_cores)
    grid = (B // bb,)

    block_bytes = bb * bytes_per_sample
    vmem_limit = int(min(max(4 * block_bytes + 2 * weight_bytes + (2 << 20),
                             16 << 20), vmem_usable))

    # TODO(synk): sweep pipeline_mode=pl.Buffered(3) on the x spec if a trace
    # shows exposed DMA at block boundaries (expected only a few percent).
    out = pl.pallas_call(
        kern,
        out_shape=jax.ShapeDtypeStruct(xk.shape, xk.dtype),
        grid_spec=pltpu.PrefetchScalarGridSpec(
            num_scalar_prefetch=0,
            grid=grid,
            in_specs=[pl.BlockSpec((bb,) + blk_tail, lambda i: (i, 0, 0))] + w_specs,
            out_specs=pl.BlockSpec((bb,) + blk_tail, lambda i: (i, 0, 0)),
        ),
        input_output_aliases=({0: 0} if donate else {}),
        compiler_params=pltpu.CompilerParams(
            dimension_semantics=("parallel",),
            vmem_limit_bytes=vmem_limit,
        ),
    )(xk, *w_args)
    return jnp.transpose(out, (0, 2, 1)) if channels_last else out


def _se_two_pass(x3, w1, b1, w2, b2, *, inv_hw, vmem_usable, weight_bytes,
                 donate, itemsize):
    B, C, HW = x3.shape
    hidden = w1.shape[0]

    # Lane-dense HW tiles (multiples of 128), ~4 MiB per tile.
    tile_target = min(4 << 20, max(1 << 20, (vmem_usable - 2 * weight_bytes) // 6))
    thw = max(128, (tile_target // (C * itemsize)) // 128 * 128)
    if thw >= HW:
        thw = HW
    n_hw = pl.cdiv(HW, thw)
    needs_mask = (HW % thw) != 0
    tile_bytes = C * thw * itemsize
    vmem_limit = int(min(max(4 * tile_bytes + 2 * weight_bytes + (4 << 20),
                             16 << 20), vmem_usable))

    b1c = b1.reshape(hidden, 1)
    b2c = b2.reshape(C, 1)

    # Pass 1: per-(b, c) sums over HW tiles -> SE MLP -> sigmoid gates (B, C, 1) f32.
    gate_kern = functools.partial(_se_gate_kernel, inv_hw=inv_hw,
                                  hw_total=HW, needs_mask=needs_mask)
    gates = pl.pallas_call(
        gate_kern,
        out_shape=jax.ShapeDtypeStruct((B, C, 1), jnp.float32),
        grid_spec=pltpu.PrefetchScalarGridSpec(
            num_scalar_prefetch=0,
            grid=(B, n_hw),
            in_specs=[
                pl.BlockSpec((1, C, thw), lambda b, k: (b, 0, k)),
                pl.BlockSpec((hidden, C), lambda b, k: (0, 0)),
                pl.BlockSpec((hidden, 1), lambda b, k: (0, 0)),
                pl.BlockSpec((C, hidden), lambda b, k: (0, 0)),
                pl.BlockSpec((C, 1), lambda b, k: (0, 0)),
            ],
            out_specs=pl.BlockSpec((1, C, 1), lambda b, k: (b, 0, 0)),
            scratch_shapes=[pltpu.VMEM((C, 1), jnp.float32)],
        ),
        compiler_params=pltpu.CompilerParams(
            dimension_semantics=("parallel", "arbitrary"),
            vmem_limit_bytes=vmem_limit,
        ),
    )(x3, w1, b1c, w2, b2c)

    # Pass 2: HW-tiled broadcast scale (lane-dense in/out tiles).
    out3 = pl.pallas_call(
        _se_scale_kernel,
        out_shape=jax.ShapeDtypeStruct((B, C, HW), x3.dtype),
        grid_spec=pltpu.PrefetchScalarGridSpec(
            num_scalar_prefetch=0,
            grid=(B, n_hw),
            in_specs=[
                pl.BlockSpec((1, C, 1), lambda b, k: (b, 0, 0)),
                pl.BlockSpec((1, C, thw), lambda b, k: (b, 0, k)),
            ],
            out_specs=pl.BlockSpec((1, C, thw), lambda b, k: (b, 0, k)),
        ),
        input_output_aliases=({1: 0} if donate else {}),
        compiler_params=pltpu.CompilerParams(
            dimension_semantics=("parallel", "parallel"),
            vmem_limit_bytes=vmem_limit,
        ),
    )(gates, x3)
    return out3


def channel_attention(x_nchw, w1, b1, w2, b2, *, donate=False):
    """SE / Channel_Attention forward pass.

    x_nchw: (B, C, H, W).  w1: (hidden, C), b1: (hidden,), w2: (C, hidden), b2: (C,)
    (PyTorch nn.Linear layout).  donate=True aliases the output onto the input
    HBM buffer (only beneficial under jit with a donated argument).
    """
    B, C, H, W = x_nchw.shape
    hidden = w1.shape[0]
    HW = H * W
    inv_hw = 1.0 / float(HW)
    itemsize = jnp.dtype(x_nchw.dtype).itemsize

    _, vmem_usable, two_cores = _tpu_vmem_budget()
    weight_bytes = 4 * (w1.size + w2.size + b1.size + b2.size)
    bytes_per_sample = C * HW * itemsize

    # Free reshape: NCHW is contiguous with HW last — no transpose.
    x3 = x_nchw.reshape(B, C, HW)

    if 4 * bytes_per_sample + 2 * weight_bytes + (2 << 20) <= vmem_usable:
        out3 = _se_fused(x3, w1, b1, w2, b2, inv_hw=inv_hw,
                         vmem_usable=vmem_usable, two_cores=two_cores,
                         bytes_per_sample=bytes_per_sample,
                         weight_bytes=weight_bytes, donate=donate)
    else:
        out3 = _se_two_pass(x3, w1, b1, w2, b2, inv_hw=inv_hw,
                            vmem_usable=vmem_usable, weight_bytes=weight_bytes,
                            donate=donate, itemsize=itemsize)
    return out3.reshape(B, C, H, W)


def channel_attention_ref(x, w1, b1, w2, b2):
    """Plain-JAX (full-f32) reference matching the PyTorch module."""
    avg = jnp.mean(x, axis=(2, 3))                                       # (B, C)
    h = jnp.maximum(jnp.dot(avg, w1.T, precision=_HIGHEST) + b1, 0.0)    # (B, hidden)
    y = jax.nn.sigmoid(jnp.dot(h, w2.T, precision=_HIGHEST) + b2)        # (B, C)
    return x * y[:, :, None, None]


if __name__ == "__main__":
    # Small shapes consistent with the module (channels divisible by reduction=16).
    B, C, H, W = 2, 32, 16, 16
    reduction = 16
    hidden = C // reduction

    key = jax.random.PRNGKey(0)
    kx, k1, k2, k3, k4 = jax.random.split(key, 5)

    x = jax.random.normal(kx, (B, C, H, W), dtype=jnp.float32)
    # nn.Linear layout: weight (out, in), bias (out,).
    w1 = jax.random.normal(k1, (hidden, C), dtype=jnp.float32) * 0.1
    b1 = jax.random.normal(k2, (hidden,), dtype=jnp.float32) * 0.1
    w2 = jax.random.normal(k3, (C, hidden), dtype=jnp.float32) * 0.1
    b2 = jax.random.normal(k4, (C,), dtype=jnp.float32) * 0.1

    out = channel_attention(x, w1, b1, w2, b2)   # donate=False: x is not clobbered
    out = jax.block_until_ready(out)

    ref = channel_attention_ref(x, w1, b1, w2, b2)

    assert out.shape == (B, C, H, W)
    assert jnp.allclose(out, ref, atol=1e-5, rtol=1e-5), "mismatch vs reference"

    print("KERNEL_OK")
</pallas_src>

<mosaic_0001>
module attributes {stable_mosaic.version = 11 : i64} {
  func.func @_se_fused_kernel(%arg0: i32, %arg1: memref<1x32x256xf32, #tpu.memory_space<vmem>>, %arg2: memref<2x32xf32, #tpu.memory_space<vmem>>, %arg3: memref<2x1xf32, #tpu.memory_space<vmem>>, %arg4: memref<32x2xf32, #tpu.memory_space<vmem>>, %arg5: memref<32x1xf32, #tpu.memory_space<vmem>>, %arg6: memref<1x32x256xf32, #tpu.memory_space<vmem>>) attributes {dimension_semantics = [#tpu.dimension_semantics<parallel>], iteration_bounds = array<i64: 2>, scalar_prefetch = 0 : i64, scratch_operands = 0 : i64, tpu.core_type = #tpu.core_type<tc>, window_params = [{transform_indices = @transform_0, window_bounds = array<i64: 1, 32, 256>}, {pipeline_mode = #tpu.pipeline_mode<synchronous>, transform_indices = @transform_1, window_bounds = array<i64: 2, 32>}, {pipeline_mode = #tpu.pipeline_mode<synchronous>, transform_indices = @transform_2, window_bounds = array<i64: 2, 1>}, {pipeline_mode = #tpu.pipeline_mode<synchronous>, transform_indices = @transform_3, window_bounds = array<i64: 32, 2>}, {pipeline_mode = #tpu.pipeline_mode<synchronous>, transform_indices = @transform_4, window_bounds = array<i64: 32, 1>}, {transform_indices = @transform_5, window_bounds = array<i64: 1, 32, 256>}]} {
    %cst = arith.constant 1.000000e+00 : f32
    %0 = vector.broadcast %cst : f32 to vector<256x1xf32>
    %c0 = arith.constant 0 : index
    %c0_0 = arith.constant 0 : index
    %c0_1 = arith.constant 0 : index
    %1 = vector.load %arg1[%c0, %c0_0, %c0_1] : memref<1x32x256xf32, #tpu.memory_space<vmem>>, vector<1x32x256xf32>
    %2 = vector.shape_cast %1 : vector<1x32x256xf32> to vector<32x256xf32>
    %cst_2 = arith.constant dense<0.000000e+00> : vector<32x1xf32>
    %3 = tpu.matmul %2, %0, %cst_2 {dimension_numbers = #tpu.dot_dimension_numbers<[1], [0], [0], [1], [0, 0, 1, 1], [], []>, precision = #tpu.contract_precision<fp32>} : vector<32x256xf32>, vector<256x1xf32>, vector<32x1xf32> -> vector<32x1xf32>
    %cst_3 = arith.constant 3.906250e-03 : f32
    %4 = vector.broadcast %cst_3 : f32 to vector<32x1xf32>
    %5 = arith.mulf %3, %4 : vector<32x1xf32>
    %c0_4 = arith.constant 0 : index
    %c0_5 = arith.constant 0 : index
    %6 = vector.load %arg2[%c0_4, %c0_5] : memref<2x32xf32, #tpu.memory_space<vmem>>, vector<2x32xf32>
    %cst_6 = arith.constant dense<0.000000e+00> : vector<2x1xf32>
    %7 = tpu.matmul %6, %5, %cst_6 {dimension_numbers = #tpu.dot_dimension_numbers<[1], [0], [0], [1], [0, 0, 1, 1], [], []>, precision = #tpu.contract_precision<fp32>} : vector<2x32xf32>, vector<32x1xf32>, vector<2x1xf32> -> vector<2x1xf32>
    %c0_7 = arith.constant 0 : index
    %c0_8 = arith.constant 0 : index
    %8 = vector.load %arg3[%c0_7, %c0_8] : memref<2x1xf32, #tpu.memory_space<vmem>>, vector<2x1xf32>
    %9 = arith.addf %7, %8 : vector<2x1xf32>
    %cst_9 = arith.constant 0.000000e+00 : f32
    %10 = vector.broadcast %cst_9 : f32 to vector<2x1xf32>
    %11 = arith.maximumf %9, %10 : vector<2x1xf32>
    %c0_10 = arith.constant 0 : index
    %c0_11 = arith.constant 0 : index
    %12 = vector.load %arg4[%c0_10, %c0_11] : memref<32x2xf32, #tpu.memory_space<vmem>>, vector<32x2xf32>
    %cst_12 = arith.constant dense<0.000000e+00> : vector<32x1xf32>
    %13 = tpu.matmul %12, %11, %cst_12 {dimension_numbers = #tpu.dot_dimension_numbers<[1], [0], [0], [1], [0, 0, 1, 1], [], []>, precision = #tpu.contract_precision<fp32>} : vector<32x2xf32>, vector<2x1xf32>, vector<32x1xf32> -> vector<32x1xf32>
    %c0_13 = arith.constant 0 : index
    %c0_14 = arith.constant 0 : index
    %14 = vector.load %arg5[%c0_13, %c0_14] : memref<32x1xf32, #tpu.memory_space<vmem>>, vector<32x1xf32>
    %15 = arith.addf %13, %14 : vector<32x1xf32>
    %16 = arith.negf %15 : vector<32x1xf32>
    %17 = math.exp %16 : vector<32x1xf32>
    %cst_15 = arith.constant 1.000000e+00 : f32
    %18 = vector.broadcast %cst_15 : f32 to vector<32x1xf32>
    %19 = arith.addf %18, %17 : vector<32x1xf32>
    %20 = arith.divf %18, %19 : vector<32x1xf32>
    %21 = vector.broadcast %20 : vector<32x1xf32> to vector<32x256xf32>
    %22 = arith.mulf %2, %21 : vector<32x256xf32>
    %c0_16 = arith.constant 0 : index
    %c0_17 = arith.constant 0 : index
    %c0_18 = arith.constant 0 : index
    %23 = vector.load %arg6[%c0_16, %c0_17, %c0_18] : memref<1x32x256xf32, #tpu.memory_space<vmem>>, vector<1x32x256xf32>
    %24 = vector.shape_cast %23 : vector<1x32x256xf32> to vector<32x256xf32>
    %25 = vector.shape_cast %22 : vector<32x256xf32> to vector<1x32x256xf32>
    tpu.vector_store %arg6[%c0_16, %c0_17, %c0_18], %25 {strides = array<i32>} : memref<1x32x256xf32, #tpu.memory_space<vmem>>, vector<1x32x256xf32>,
    return
  }
  func.func @transform_0(%arg0: i32) -> (i32, i32, i32) {
    %c0_i32 = arith.constant 0 : i32
    %c0_i32_0 = arith.constant 0 : i32
    %c0_i32_1 = arith.constant 0 : i32
    return %arg0, %c0_i32, %c0_i32_0 : i32, i32, i32
  }
  func.func @transform_1(%arg0: i32) -> (i32, i32) {
    %c0_i32 = arith.constant 0 : i32
    %c0_i32_0 = arith.constant 0 : i32
    %c0_i32_1 = arith.constant 0 : i32
    return %c0_i32, %c0_i32_0 : i32, i32
  }
  func.func @transform_2(%arg0: i32) -> (i32, i32) {
    %c0_i32 = arith.constant 0 : i32
    %c0_i32_0 = arith.constant 0 : i32
    %c0_i32_1 = arith.constant 0 : i32
    return %c0_i32, %c0_i32_0 : i32, i32
  }
  func.func @transform_3(%arg0: i32) -> (i32, i32) {
    %c0_i32 = arith.constant 0 : i32
    %c0_i32_0 = arith.constant 0 : i32
    %c0_i32_1 = arith.constant 0 : i32
    return %c0_i32, %c0_i32_0 : i32, i32
  }
  func.func @transform_4(%arg0: i32) -> (i32, i32) {
    %c0_i32 = arith.constant 0 : i32
    %c0_i32_0 = arith.constant 0 : i32
    %c0_i32_1 = arith.constant 0 : i32
    return %c0_i32, %c0_i32_0 : i32, i32
  }
  func.func @transform_5(%arg0: i32) -> (i32, i32, i32) {
    %c0_i32 = arith.constant 0 : i32
    %c0_i32_0 = arith.constant 0 : i32
    %c0_i32_1 = arith.constant 0 : i32
    return %arg0, %c0_i32, %c0_i32_0 : i32, i32, i32
  }
}

</mosaic_0001>

<llo_original>
// kernel: tpu_custom_call.1
$region0: #{tpu_custom_call.1}
  #allocation0 [shape = 'u32[]', space=smem, size = 0x4, offset = 0x4, fixed_abs, tag = 'smem constant byte address 0x4 - core index']
  #allocation1 [shape = 'u32[144,128]{1,0:T(1,128)}', space=vmem, size = 0x12000, scoped, tag = 'internal scratch']
  %s0 = inlined_call_operand.hbm [shape: f32[2,32,256], index: 0, kind: input, shape index: {}]
  %s1 = inlined_call_operand.vmem [shape: f32[2,32], index: 1, kind: input, shape index: {}]
  %s2 = inlined_call_operand.vmem [shape: f32[2,1], index: 2, kind: input, shape index: {}]
  %s3 = inlined_call_operand.vmem [shape: f32[32,2], index: 3, kind: input, shape index: {}]
  %s4 = inlined_call_operand.vmem [shape: f32[32,1], index: 4, kind: input, shape index: {}]
  %s5 = inlined_call_operand.hbm [shape: f32[2,32,256], index: 5, kind: output, shape index: {}]
  %s6 = sld [smem:[#allocation0]]
  $region57: #{tpu_custom_call.1} parent=0
    _
  %s8 = ssub.s32 1, %s6
  %s9 = scalar_select 0, %s8, %s6
  $region1: #{tpu_custom_call.1} parent=0
    #allocation2 [shape = 'u8[65536]{0}', space=vmem, size = 0x10000, scoped, tag = 'input window, operand 0']
    #allocation3 [shape = 's32[2]{0}', space=sflag, size = 0x8, scoped, tag = 'scoped memory for tpu_custom_call.1']
    #allocation4 [shape = 's32[2]{0}', space=sflag, size = 0x8, scoped, tag = 'scoped memory for tpu_custom_call.1']
    #allocation5 [shape = 'u8[65536]{0}', space=vmem, size = 0x10000, scoped, tag = 'output window, operand 0']
    %10 = vsyncpa [#allocation3], 0
    %s11 = scalar_lea.sflag [#allocation3], 1
    %12 = vsyncpa %s11, 0
    %13 = vsyncpa [#allocation4], 0
    %s14 = scalar_lea.sflag [#allocation4], 1
    %15 = vsyncpa %s14, 0
    loop: start=0, step=1, limit=4
    $region2: #{tpu_custom_call.1} parent=1 // loop_pre_header
      _
    $region3: #{tpu_custom_call.1} parent=1 // loop_header
      %s17 = sphi 0, %s21
      %p18 = scmp.ge.s32.totalorder %s17, 4
      %s27 = sphi 0, %s29
      %s30 = sphi 0, %s27
      %s31 = sphi 0, %s30
      %s47 = sphi 0, %s31
      %s51 = sphi 0, %s51
      %s53 = sphi 0, %s51
      %s54 = sphi 0, %s53
      %s68 = sphi 0, %s54
      %s72 = sphi 0, %s72
      %s74 = sphi 0, %s72
      %s75 = sphi 0, %s74
      %s89 = sphi 0, %s75
      %s93 = sphi 0, %s93
      %s95 = sphi 0, %s93
      %s96 = sphi 0, %s95
      %s110 = sphi 0, %s96
      %s114 = sphi 0, %s114
      %s116 = sphi 0, %s114
      %s117 = sphi 0, %s116
      %s131 = sphi 0, %s117
      %s137 = sphi 0, %s139
      %s140 = sphi 0, %s137
      %s141 = sphi 0, %s140
      %s157 = sphi 0, %s141
    $region4: #{tpu_custom_call.1} parent=1 // loop_header_branch
      %20 = sbr.rel (%p18) target = $region8
    $region5: #{tpu_custom_call.1} parent=1 // loop_body
      %s22 = ssub.s32 %s17, 1
      %s23 = ssub.s32 %s17, 2
      %s24 = sadd.s32 %s17, 1
      %s25 = ssub.s32 %s17, %s24
      %p26 = scmp.eq.s32.totalorder %s25, 0
      %s28 = sadd.s32 %s27, 1
      %s29 = scalar_select %p26, %s27, %s28
      %p32 = pneg %p26
      %p33 = scmp.eq.s32.totalorder %s17, 1
      %p34 = por %p32, %p33
      %p35 = scmp.ne.s32.totalorder %s27, %s30
      %p36 = scmp.eq.s32.totalorder %s17, 0
      %p37 = por %p35, %p36
      %p38 = scmp.ne.s32.totalorder %s27, %s30
      %p39 = scmp.eq.s32.totalorder %s22, 1
      %p40 = por %p38, %p39
      %p41 = scmp.ne.s32.totalorder %s30, %s31
      %p42 = scmp.eq.s32.totalorder %s22, 0
      %p43 = por %p41, %p42
      %p44 = scmp.ne.s32.totalorder %s30, %s31
      %p45 = scmp.eq.s32.totalorder %s23, 1
      %p46 = por %p44, %p45
      %p48 = scmp.ne.s32.totalorder %s31, %s47
      %p49 = scmp.eq.s32.totalorder %s23, 0
      %p50 = por %p48, %p49
      %s52 = sadd.s32 %s51, 1
      %p55 = scmp.eq.s32.totalorder %s17, 1
      %p56 = scmp.ne.s32.totalorder %s51, %s53
      %p57 = scmp.eq.s32.totalorder %s17, 0
      %p58 = por %p56, %p57
      %p59 = scmp.ne.s32.totalorder %s51, %s53
      %p60 = scmp.eq.s32.totalorder %s22, 1
      %p61 = por %p59, %p60
      %p62 = scmp.ne.s32.totalorder %s53, %s54
      %p63 = scmp.eq.s32.totalorder %s22, 0
      %p64 = por %p62, %p63
      %p65 = scmp.ne.s32.totalorder %s53, %s54
      %p66 = scmp.eq.s32.totalorder %s23, 1
      %p67 = por %p65, %p66
      %p69 = scmp.ne.s32.totalorder %s54, %s68
      %p70 = scmp.eq.s32.totalorder %s23, 0
      %p71 = por %p69, %p70
      %s73 = sadd.s32 %s72, 1
      %p76 = scmp.eq.s32.totalorder %s17, 1
      %p77 = scmp.ne.s32.totalorder %s72, %s74
      %p78 = scmp.eq.s32.totalorder %s17, 0
      %p79 = por %p77, %p78
      %p80 = scmp.ne.s32.totalorder %s72, %s74
      %p81 = scmp.eq.s32.totalorder %s22, 1
      %p82 = por %p80, %p81
      %p83 = scmp.ne.s32.totalorder %s74, %s75
      %p84 = scmp.eq.s32.totalorder %s22, 0
      %p85 = por %p83, %p84
      %p86 = scmp.ne.s32.totalorder %s74, %s75
      %p87 = scmp.eq.s32.totalorder %s23, 1
      %p88 = por %p86, %p87
      %p90 = scmp.ne.s32.totalorder %s75, %s89
      %p91 = scmp.eq.s32.totalorder %s23, 0
      %p92 = por %p90, %p91
      %s94 = sadd.s32 %s93, 1
      %p97 = scmp.eq.s32.totalorder %s17, 1
      %p98 = scmp.ne.s32.totalorder %s93, %s95
      %p99 = scmp.eq.s32.totalorder %s17, 0
      %p100 = por %p98, %p99
      %p101 = scmp.ne.s32.totalorder %s93, %s95
      %p102 = scmp.eq.s32.totalorder %s22, 1
      %p103 = por %p101, %p102
      %p104 = scmp.ne.s32.totalorder %s95, %s96
      %p105 = scmp.eq.s32.totalorder %s22, 0
      %p106 = por %p104, %p105
      %p107 = scmp.ne.s32.totalorder %s95, %s96
      %p108 = scmp.eq.s32.totalorder %s23, 1
      %p109 = por %p107, %p108
      %p111 = scmp.ne.s32.totalorder %s96, %s110
      %p112 = scmp.eq.s32.totalorder %s23, 0
      %p113 = por %p111, %p112
      %s115 = sadd.s32 %s114, 1
      %p118 = scmp.eq.s32.totalorder %s17, 1
      %p119 = scmp.ne.s32.totalorder %s114, %s116
      %p120 = scmp.eq.s32.totalorder %s17, 0
      %p121 = por %p119, %p120
      %p122 = scmp.ne.s32.totalorder %s114, %s116
      %p123 = scmp.eq.s32.totalorder %s22, 1
      %p124 = por %p122, %p123
      %p125 = scmp.ne.s32.totalorder %s116, %s117
      %p126 = scmp.eq.s32.totalorder %s22, 0
      %p127 = por %p125, %p126
      %p128 = scmp.ne.s32.totalorder %s116, %s117
      %p129 = scmp.eq.s32.totalorder %s23, 1
      %p130 = por %p128, %p129
      %p132 = scmp.ne.s32.totalorder %s117, %s131
      %p133 = scmp.eq.s32.totalorder %s23, 0
      %p134 = por %p132, %p133
      %s135 = ssub.s32 %s17, %s24
      %p136 = scmp.eq.s32.totalorder %s135, 0
      %s138 = sadd.s32 %s137, 1
      %s139 = scalar_select %p136, %s137, %s138
      %p142 = pneg %p136
      %p143 = scmp.eq.s32.totalorder %s17, 1
      %p144 = por %p142, %p143
      %p145 = scmp.ne.s32.totalorder %s137, %s140
      %p146 = scmp.eq.s32.totalorder %s17, 0
      %p147 = por %p145, %p146
      %p148 = scmp.ne.s32.totalorder %s137, %s140
      %p149 = scmp.eq.s32.totalorder %s22, 1
      %p150 = por %p148, %p149
      %p151 = scmp.ne.s32.totalorder %s140, %s141
      %p152 = scmp.eq.s32.totalorder %s22, 0
      %p153 = por %p151, %p152
      %p154 = scmp.ne.s32.totalorder %s140, %s141
      %p155 = scmp.eq.s32.totalorder %s23, 1
      %p156 = por %p154, %p155
      %p158 = scmp.ne.s32.totalorder %s141, %s157
      %p159 = scmp.eq.s32.totalorder %s23, 0
      %p160 = por %p158, %p159
      %p161 = scmp.le.s32.totalorder 1, %s17
      %p162 = scmp.lt.s32.totalorder %s17, 3
      %p163 = pnand %p161, %p162
      %p164 = pneg %p163
      // Predicated region
      $region9: #{tpu_custom_call.1} parent=5 // pred_check
        _
      $region10: #{tpu_custom_call.1} parent=5 // pred_check_branch
        %166 = sbr.rel (%p163) target = $region12
      $region11: #{tpu_custom_call.1} parent=5 // pred_region
        %s167 = ssub.s32 %s17, 1
        // Predicated region
        $region13: #{tpu_custom_call.1} parent=11 // pred_check
          %p168 = pneg %p64
        $region14: #{tpu_custom_call.1} parent=11 // pred_check_branch
          %170 = sbr.rel (%p168) target = $region16
        $region15: #{tpu_custom_call.1} parent=11 // pred_region
          _
        $region16: #{tpu_custom_call.1} parent=11 // pred_fallthru
          _
        // Predicated region
        $region17: #{tpu_custom_call.1} parent=11 // pred_check
          %p171 = pneg %p85
        $region18: #{tpu_custom_call.1} parent=11 // pred_check_branch
          %173 = sbr.rel (%p171) target = $region20
        $region19: #{tpu_custom_call.1} parent=11 // pred_region
          _
        $region20: #{tpu_custom_call.1} parent=11 // pred_fallthru
          _
        // Predicated region
        $region21: #{tpu_custom_call.1} parent=11 // pred_check
          %p174 = pneg %p106
        $region22: #{tpu_custom_call.1} parent=11 // pred_check_branch
          %176 = sbr.rel (%p174) target = $region24
        $region23: #{tpu_custom_call.1} parent=11 // pred_region
          _
        $region24: #{tpu_custom_call.1} parent=11 // pred_fallthru
          _
        // Predicated region
        $region25: #{tpu_custom_call.1} parent=11 // pred_check
          %p177 = pneg %p127
        $region26: #{tpu_custom_call.1} parent=11 // pred_check_branch
          %179 = sbr.rel (%p177) target = $region28
        $region27: #{tpu_custom_call.1} parent=11 // pred_region
          _
        $region28: #{tpu_custom_call.1} parent=11 // pred_fallthru
          _
      $region12: #{tpu_custom_call.1} parent=5 // pred_fallthru
        _
      %p180 = scmp.lt.s32.totalorder %s17, 2
      // Predicated region
      $region29: #{tpu_custom_call.1} parent=5 // pred_check
        %p181 = pneg %p180
      $region30: #{tpu_custom_call.1} parent=5 // pred_check_branch
        %183 = sbr.rel (%p181) target = $region32
      $region31: #{tpu_custom_call.1} parent=5 // pred_region
        // Predicated region
        $region33: #{tpu_custom_call.1} parent=31 // pred_check
          %p184 = pneg %p37
        $region34: #{tpu_custom_call.1} parent=31 // pred_check_branch
          %186 = sbr.rel (%p184) target = $region36
        $region35: #{tpu_custom_call.1} parent=31 // pred_region
          %s187 = sand.u32 %s27, 1
          %s188 = scalar_lea.sflag [#allocation3], %s187
          %s189 = sand.u32 %s27, 1
          %s190 = smul.addr %s189, 64
          %s191 = scalar_lea.vmem [#allocation2], %s190
          %s193 = ssub.s32 1024, 1024
          %194 = vsyncadd %s188, %s193
          %s195 = smul.addr %s17, 8
          %s196 = smul.addr %s195, 128
          %s197 = scalar_lea.hbm %s0, %s196
          %s198 = sshll.u32 %s191, 4
          %s199 = int_to_ptr.vmem [resolvable:$true] %s198
          %204 = dma.hbm_to_vmem [thread:$0]  %s197, 1024, %s199, %s188, 256, 256, 16
        $region36: #{tpu_custom_call.1} parent=31 // pred_fallthru
          _
      $region32: #{tpu_custom_call.1} parent=5 // pred_fallthru
        _
      %p205 = scmp.le.s32.totalorder 1, %s17
      %p206 = scmp.lt.s32.totalorder %s17, 3
      %p207 = pnand %p205, %p206
      %p208 = pneg %p207
      // Predicated region
      $region37: #{tpu_custom_call.1} parent=5 // pred_check
        _
      $region38: #{tpu_custom_call.1} parent=5 // pred_check_branch
        %210 = sbr.rel (%p207) target = $region40
      $region39: #{tpu_custom_call.1} parent=5 // pred_region
        %s211 = ssub.s32 %s17, 1
        %s212 = sand.u32 %s30, 1
        %s213 = scalar_lea.sflag [#allocation3], %s212
        %s214 = sand.u32 %s30, 1
        %s215 = smul.addr %s214, 64
        %s216 = scalar_lea.vmem [#allocation2], %s215
        // Predicated region
        $region41: #{tpu_custom_call.1} parent=39 // pred_check
          %p217 = pneg %p43
        $region42: #{tpu_custom_call.1} parent=39 // pred_check_branch
          %219 = sbr.rel (%p217) target = $region44
        $region43: #{tpu_custom_call.1} parent=39 // pred_region
          %220 = dma.done %s213, 1024
        $region44: #{tpu_custom_call.1} parent=39 // pred_fallthru
          _
        %s221 = sand.u32 %s30, 1
        %s222 = scalar_lea.sflag [#allocation3], %s221
        %s223 = sand.u32 %s30, 1
        %s224 = smul.addr %s223, 64
        %s225 = scalar_lea.vmem [#allocation2], %s224
        %p226 = pneg %p43
        %p227 = pneg %p40
        %p228 = pneg %p64
        %p229 = pneg %p61
        %p230 = pneg %p85
        %p231 = pneg %p82
        %p232 = pneg %p106
        %p233 = pneg %p103
        %p234 = pneg %p127
        %p235 = pneg %p124
        %p236 = pneg %p153
        %p237 = pneg %p150
        %s238 = sand.u32 %s140, 1
        %s239 = scalar_lea.sflag [#allocation4], %s238
        %s240 = sand.u32 %s140, 1
        %s241 = smul.addr %s240, 64
        %s242 = scalar_lea.vmem [#allocation5], %s241
        %v243 = vld [vmem:[%s216] sm:$0xff]
        %v244 = vld [vmem:[%s216 + $0x8] sm:$0xff]
        %v245 = vld [vmem:[%s216 + $0x10] sm:$0xff]
        %v246 = vld [vmem:[%s216 + $0x18] sm:$0xff]
        %v247 = vld [vmem:[%s216 + $0x20] sm:$0xff]
        %v248 = vld [vmem:[%s216 + $0x28] sm:$0xff]
        %v249 = vld [vmem:[%s216 + $0x30] sm:$0xff]
        %v250 = vld [vmem:[%s216 + $0x38] sm:$0xff]
        %251 = vmatprep.subr.mxu0 0.0
        %252 = vmatpush1.msra.mxu0 1.0
        %253 = vmatprep.subr.mxu0 0.0
        %254 = vmatpush1.msra.mxu0 1.0
        %255 = vmatprep.subr.mxu0 0.0
        %256 = vmatpush1.msra.mxu0 1.0
        %257 = vmatprep.subr.mxu0 0.0
        %258 = vmatpush1.msra.mxu0 1.0
        %259 = vmatprep.subr.mxu0 0.0
        %260 = vmatpush1.msra.mxu0 1.0
        %261 = vmatprep.subr.mxu0 0.0
        %262 = vmatpush1.msra.mxu0 1.0
        %263 = vmatprep.subr.mxu0 0.0
        %264 = vmatpush1.msra.mxu0 1.0
        %265 = vmatprep.subr.mxu0 0.0
        %266 = vmatpush1.msra.mxu0 1.0
        %267 = vmatprep.subr.mxu0 0.0
        %268 = vmatpush1.msra.mxu0 1.0
        %269 = vmatprep.subr.mxu0 0.0
        %270 = vmatpush1.msra.mxu0 1.0
        %271 = vmatprep.subr.mxu0 0.0
        %272 = vmatpush1.msra.mxu0 1.0
        %273 = vmatprep.subr.mxu0 0.0
        %274 = vmatpush1.msra.mxu0 1.0
        %275 = vmatprep.subr.mxu0 0.0
        %276 = vmatpush1.msra.mxu0 1.0
        %277 = vmatprep.subr.mxu0 0.0
        %278 = vmatpush1.msra.mxu0 1.0
        %279 = vmatprep.subr.mxu0 0.0
        %280 = vmatpush1.msra.mxu0 1.0
        %281 = vmatprep.subr.mxu0 0.0
        %282 = vmatpush1.msra.mxu0 1.0
        %283 = vmatprep.subr.mxu0 0.0
        %284 = vmatpush2.msra.mxu0 1.0
        %285 = vmatprep.subr.mxu0 0.0
        %286 = vmatpush2.msra.mxu0 1.0
        %287 = vmatprep.subr.mxu0 0.0
        %288 = vmatpush2.msra.mxu0 1.0
        %289 = vmatprep.subr.mxu0 0.0
        %290 = vmatpush2.msra.mxu0 1.0
        %291 = vmatprep.subr.mxu0 0.0
        %292 = vmatpush2.msra.mxu0 1.0
        %293 = vmatprep.subr.mxu0 0.0
        %294 = vmatpush2.msra.mxu0 1.0
        %295 = vmatprep.subr.mxu0 0.0
        %296 = vmatpush2.msra.mxu0 1.0
        %297 = vmatprep.subr.mxu0 0.0
        %298 = vmatpush2.msra.mxu0 1.0
        %299 = vmatprep.subr.mxu0 0.0
        %300 = vmatpush2.msra.mxu0 1.0
        %301 = vmatprep.subr.mxu0 0.0
        %302 = vmatpush2.msra.mxu0 1.0
        %303 = vmatprep.subr.mxu0 0.0
        %304 = vmatpush2.msra.mxu0 1.0
        %305 = vmatprep.subr.mxu0 0.0
        %306 = vmatpush2.msra.mxu0 1.0
        %307 = vmatprep.subr.mxu0 0.0
        %308 = vmatpush2.msra.mxu0 1.0
        %309 = vmatprep.subr.mxu0 0.0
        %310 = vmatpush2.msra.mxu0 1.0
        %311 = vmatprep.subr.mxu0 0.0
        %312 = vmatpush2.msra.mxu0 1.0
        %313 = vmatprep.subr.mxu0 0.0
        %314 = vmatpush2.msra.mxu0 1.0
        %v315 = vand.u32 %v244, 4294901760
        %v316 = vsub.f32 %v244, %v315
        %v317 = vand.u32 %v316, 4294901760
        %v318 = vsub.f32 %v316, %v317
        %v319 = vand.u32 %v318, 4294901760
        %320 = vmatprep.mubr.f32.mxu0 %v319
        %v321 = vand.u32 %v243, 4294901760
        %v322 = vsub.f32 %v243, %v321
        %v323 = vand.u32 %v322, 4294901760
        %v324 = vsub.f32 %v322, %v323
        %v325 = vand.u32 %v324, 4294901760
        %326 = vmatmul.mubr.f32.gmra.mxu0 %v325
        %v327 = vpop.f32.mrf.mxu0
        %v328 = vadd.f32 0.0, %v327
        %v329 = vpop.f32.mrf.mxu0
        %v330 = vand.u32 %v246, 4294901760
        %v331 = vsub.f32 %v246, %v330
        %v332 = vand.u32 %v331, 4294901760
        %v333 = vsub.f32 %v331, %v332
        %v334 = vand.u32 %v333, 4294901760
        %335 = vmatprep.mubr.f32.mxu0 %v334
        %v336 = vand.u32 %v245, 4294901760
        %v337 = vsub.f32 %v245, %v336
        %v338 = vand.u32 %v337, 4294901760
        %v339 = vsub.f32 %v337, %v338
        %v340 = vand.u32 %v339, 4294901760
        %341 = vmatmul.mubr.f32.gmra.mxu0 %v340
        %v342 = vpop.f32.mrf.mxu0
        %v343 = vadd.f32 0.0, %v342
        %v344 = vpop.f32.mrf.mxu0
        %v345 = vand.u32 %v248, 4294901760
        %v346 = vsub.f32 %v248, %v345
        %v347 = vand.u32 %v346, 4294901760
        %v348 = vsub.f32 %v346, %v347
        %v349 = vand.u32 %v348, 4294901760
        %350 = vmatprep.mubr.f32.mxu0 %v349
        %v351 = vand.u32 %v247, 4294901760
        %v352 = vsub.f32 %v247, %v351
        %v353 = vand.u32 %v352, 4294901760
        %v354 = vsub.f32 %v352, %v353
        %v355 = vand.u32 %v354, 4294901760
        %356 = vmatmul.mubr.f32.gmra.mxu0 %v355
        %v357 = vpop.f32.mrf.mxu0
        %v358 = vadd.f32 0.0, %v357
        %v359 = vpop.f32.mrf.mxu0
        %v360 = vand.u32 %v250, 4294901760
        %v361 = vsub.f32 %v250, %v360
        %v362 = vand.u32 %v361, 4294901760
        %v363 = vsub.f32 %v361, %v362
        %v364 = vand.u32 %v363, 4294901760
        %365 = vmatprep.mubr.f32.mxu0 %v364
        %v366 = vand.u32 %v249, 4294901760
        %v367 = vsub.f32 %v249, %v366
        %v368 = vand.u32 %v367, 4294901760
        %v369 = vsub.f32 %v367, %v368
        %v370 = vand.u32 %v369, 4294901760
        %371 = vmatmul.mubr.f32.gmra.mxu0 %v370
        %v372 = vpop.f32.mrf.mxu0
        %v373 = vadd.f32 0.0, %v372
        %v374 = vpop.f32.mrf.mxu0
        %375 = vdwg.mxu0
        %376 = vmatprep.subr.mxu0 0.0
        %377 = vmatpush1.msra.mxu0 0.0
        %378 = vmatprep.subr.mxu0 0.0
        %379 = vmatpush1.msra.mxu0 0.0
        %380 = vmatprep.subr.mxu0 0.0
        %381 = vmatpush1.msra.mxu0 0.0
        %382 = vmatprep.subr.mxu0 0.0
        %383 = vmatpush1.msra.mxu0 0.0
        %384 = vmatprep.subr.mxu0 0.0
        %385 = vmatpush1.msra.mxu0 0.0
        %386 = vmatprep.subr.mxu0 0.0
        %387 = vmatpush1.msra.mxu0 0.0
        %388 = vmatprep.subr.mxu0 0.0
        %389 = vmatpush1.msra.mxu0 0.0
        %390 = vmatprep.subr.mxu0 0.0
        %391 = vmatpush1.msra.mxu0 0.0
        %392 = vmatprep.subr.mxu0 0.0
        %393 = vmatpush1.msra.mxu0 0.0
        %394 = vmatprep.subr.mxu0 0.0
        %395 = vmatpush1.msra.mxu0 0.0
        %396 = vmatprep.subr.mxu0 0.0
        %397 = vmatpush1.msra.mxu0 0.0
        %398 = vmatprep.subr.mxu0 0.0
        %399 = vmatpush1.msra.mxu0 0.0
        %400 = vmatprep.subr.mxu0 0.0
        %401 = vmatpush1.msra.mxu0 0.0
        %402 = vmatprep.subr.mxu0 0.0
        %403 = vmatpush1.msra.mxu0 0.0
        %404 = vmatprep.subr.mxu0 0.0
        %405 = vmatpush1.msra.mxu0 0.0
        %406 = vmatprep.subr.mxu0 0.0
        %407 = vmatpush1.msra.mxu0 0.0
        %408 = vmatprep.subr.mxu0 0.0
        %409 = vmatpush2.msra.mxu0 0.0
        %410 = vmatprep.subr.mxu0 0.0
        %411 = vmatpush2.msra.mxu0 0.0
        %412 = vmatprep.subr.mxu0 0.0
        %413 = vmatpush2.msra.mxu0 0.0
        %414 = vmatprep.subr.mxu0 0.0
        %415 = vmatpush2.msra.mxu0 0.0
        %416 = vmatprep.subr.mxu0 0.0
        %417 = vmatpush2.msra.mxu0 0.0
        %418 = vmatprep.subr.mxu0 0.0
        %419 = vmatpush2.msra.mxu0 0.0
        %420 = vmatprep.subr.mxu0 0.0
        %421 = vmatpush2.msra.mxu0 0.0
        %422 = vmatprep.subr.mxu0 0.0
        %423 = vmatpush2.msra.mxu0 0.0
        %424 = vmatprep.subr.mxu0 0.0
        %425 = vmatpush2.msra.mxu0 0.0
        %426 = vmatprep.subr.mxu0 0.0
        %427 = vmatpush2.msra.mxu0 0.0
        %428 = vmatprep.subr.mxu0 0.0
        %429 = vmatpush2.msra.mxu0 0.0
        %430 = vmatprep.subr.mxu0 0.0
        %431 = vmatpush2.msra.mxu0 0.0
        %432 = vmatprep.subr.mxu0 0.0
        %433 = vmatpush2.msra.mxu0 0.0
        %434 = vmatprep.subr.mxu0 0.0
        %435 = vmatpush2.msra.mxu0 0.0
        %436 = vmatprep.subr.mxu0 0.0
        %437 = vmatpush2.msra.mxu0 0.0
        %438 = vmatprep.subr.mxu0 0.0
        %439 = vmatpush2.msra.mxu0 0.0
        %v440 = vand.u32 %v244, 4294901760
        %441 = vmatprep.mubr.f32.mxu0 %v440
        %v442 = vand.u32 %v243, 4294901760
        %443 = vmatmul.mubr.f32.gmra.mxu0 %v442
        %v444 = vpop.f32.mrf.mxu0
        %v445 = vadd.f32 %v328, %v444
        %v446 = vpop.f32.mrf.mxu0
        %v447 = vand.u32 %v246, 4294901760
        %448 = vmatprep.mubr.f32.mxu0 %v447
        %v449 = vand.u32 %v245, 4294901760
        %450 = vmatmul.mubr.f32.gmra.mxu0 %v449
        %v451 = vpop.f32.mrf.mxu0
        %v452 = vadd.f32 %v343, %v451
        %v453 = vpop.f32.mrf.mxu0
        %v454 = vand.u32 %v248, 4294901760
        %455 = vmatprep.mubr.f32.mxu0 %v454
        %v456 = vand.u32 %v247, 4294901760
        %457 = vmatmul.mubr.f32.gmra.mxu0 %v456
        %v458 = vpop.f32.mrf.mxu0
        %v459 = vadd.f32 %v358, %v458
        %v460 = vpop.f32.mrf.mxu0
        %v461 = vand.u32 %v250, 4294901760
        %462 = vmatprep.mubr.f32.mxu0 %v461
        %v463 = vand.u32 %v249, 4294901760
        %464 = vmatmul.mubr.f32.gmra.mxu0 %v463
        %v465 = vpop.f32.mrf.mxu0
        %v466 = vadd.f32 %v373, %v465
        %v467 = vpop.f32.mrf.mxu0
        %468 = vdwg.mxu0
        %469 = vmatprep.subr.mxu0 0.0
        %470 = vmatpush1.msra.mxu0 0.0
        %471 = vmatprep.subr.mxu0 0.0
        %472 = vmatpush1.msra.mxu0 0.0
        %473 = vmatprep.subr.mxu0 0.0
        %474 = vmatpush1.msra.mxu0 0.0
        %475 = vmatprep.subr.mxu0 0.0
        %476 = vmatpush1.msra.mxu0 0.0
        %477 = vmatprep.subr.mxu0 0.0
        %478 = vmatpush1.msra.mxu0 0.0
        %479 = vmatprep.subr.mxu0 0.0
        %480 = vmatpush1.msra.mxu0 0.0
        %481 = vmatprep.subr.mxu0 0.0
        %482 = vmatpush1.msra.mxu0 0.0
        %483 = vmatprep.subr.mxu0 0.0
        %484 = vmatpush1.msra.mxu0 0.0
        %485 = vmatprep.subr.mxu0 0.0
        %486 = vmatpush1.msra.mxu0 0.0
        %487 = vmatprep.subr.mxu0 0.0
        %488 = vmatpush1.msra.mxu0 0.0
        %489 = vmatprep.subr.mxu0 0.0
        %490 = vmatpush1.msra.mxu0 0.0
        %491 = vmatprep.subr.mxu0 0.0
        %492 = vmatpush1.msra.mxu0 0.0
        %493 = vmatprep.subr.mxu0 0.0
        %494 = vmatpush1.msra.mxu0 0.0
        %495 = vmatprep.subr.mxu0 0.0
        %496 = vmatpush1.msra.mxu0 0.0
        %497 = vmatprep.subr.mxu0 0.0
        %498 = vmatpush1.msra.mxu0 0.0
        %499 = vmatprep.subr.mxu0 0.0
        %500 = vmatpush1.msra.mxu0 0.0
        %501 = vmatprep.subr.mxu0 0.0
        %502 = vmatpush2.msra.mxu0 0.0
        %503 = vmatprep.subr.mxu0 0.0
        %504 = vmatpush2.msra.mxu0 0.0
        %505 = vmatprep.subr.mxu0 0.0
        %506 = vmatpush2.msra.mxu0 0.0
        %507 = vmatprep.subr.mxu0 0.0
        %508 = vmatpush2.msra.mxu0 0.0
        %509 = vmatprep.subr.mxu0 0.0
        %510 = vmatpush2.msra.mxu0 0.0
        %511 = vmatprep.subr.mxu0 0.0
        %512 = vmatpush2.msra.mxu0 0.0
        %513 = vmatprep.subr.mxu0 0.0
        %514 = vmatpush2.msra.mxu0 0.0
        %515 = vmatprep.subr.mxu0 0.0
        %516 = vmatpush2.msra.mxu0 0.0
        %517 = vmatprep.subr.mxu0 0.0
        %518 = vmatpush2.msra.mxu0 0.0
        %519 = vmatprep.subr.mxu0 0.0
        %520 = vmatpush2.msra.mxu0 0.0
        %521 = vmatprep.subr.mxu0 0.0
        %522 = vmatpush2.msra.mxu0 0.0
        %523 = vmatprep.subr.mxu0 0.0
        %524 = vmatpush2.msra.mxu0 0.0
        %525 = vmatprep.subr.mxu0 0.0
        %526 = vmatpush2.msra.mxu0 0.0
        %527 = vmatprep.subr.mxu0 0.0
        %528 = vmatpush2.msra.mxu0 0.0
        %529 = vmatprep.subr.mxu0 0.0
        %530 = vmatpush2.msra.mxu0 0.0
        %531 = vmatprep.subr.mxu0 0.0
        %532 = vmatpush2.msra.mxu0 0.0
        %v533 = vand.u32 %v244, 4294901760
        %v534 = vsub.f32 %v244, %v533
        %535 = vmatprep.mubr.f32.mxu0 %v534
        %v536 = vand.u32 %v243, 4294901760
        %v537 = vsub.f32 %v243, %v536
        %538 = vmatmul.mubr.f32.gmra.mxu0 %v537
        %v539 = vpop.f32.mrf.mxu0
        %v540 = vadd.f32 %v445, %v539
        %v541 = vpop.f32.mrf.mxu0
        %v542 = vand.u32 %v246, 4294901760
        %v543 = vsub.f32 %v246, %v542
        %544 = vmatprep.mubr.f32.mxu0 %v543
        %v545 = vand.u32 %v245, 4294901760
        %v546 = vsub.f32 %v245, %v545
        %547 = vmatmul.mubr.f32.gmra.mxu0 %v546
        %v548 = vpop.f32.mrf.mxu0
        %v549 = vadd.f32 %v452, %v548
        %v550 = vpop.f32.mrf.mxu0
        %v551 = vand.u32 %v248, 4294901760
        %v552 = vsub.f32 %v248, %v551
        %553 = vmatprep.mubr.f32.mxu0 %v552
        %v554 = vand.u32 %v247, 4294901760
        %v555 = vsub.f32 %v247, %v554
        %556 = vmatmul.mubr.f32.gmra.mxu0 %v555
        %v557 = vpop.f32.mrf.mxu0
        %v558 = vadd.f32 %v459, %v557
        %v559 = vpop.f32.mrf.mxu0
        %v560 = vand.u32 %v250, 4294901760
        %v561 = vsub.f32 %v250, %v560
        %562 = vmatprep.mubr.f32.mxu0 %v561
        %v563 = vand.u32 %v249, 4294901760
        %v564 = vsub.f32 %v249, %v563
        %565 = vmatmul.mubr.f32.gmra.mxu0 %v564
        %v566 = vpop.f32.mrf.mxu0
        %v567 = vadd.f32 %v466, %v566
        %v568 = vpop.f32.mrf.mxu0
        %569 = vdwg.mxu0
        %570 = vmatprep.subr.mxu0 0.0
        %571 = vmatpush1.msra.mxu0 1.0
        %572 = vmatprep.subr.mxu0 0.0
        %573 = vmatpush1.msra.mxu0 1.0
        %574 = vmatprep.subr.mxu0 0.0
        %575 = vmatpush1.msra.mxu0 1.0
        %576 = vmatprep.subr.mxu0 0.0
        %577 = vmatpush1.msra.mxu0 1.0
        %578 = vmatprep.subr.mxu0 0.0
        %579 = vmatpush1.msra.mxu0 1.0
        %580 = vmatprep.subr.mxu0 0.0
        %581 = vmatpush1.msra.mxu0 1.0
        %582 = vmatprep.subr.mxu0 0.0
        %583 = vmatpush1.msra.mxu0 1.0
        %584 = vmatprep.subr.mxu0 0.0
        %585 = vmatpush1.msra.mxu0 1.0
        %586 = vmatprep.subr.mxu0 0.0
        %587 = vmatpush1.msra.mxu0 1.0
        %588 = vmatprep.subr.mxu0 0.0
        %589 = vmatpush1.msra.mxu0 1.0
        %590 = vmatprep.subr.mxu0 0.0
        %591 = vmatpush1.msra.mxu0 1.0
        %592 = vmatprep.subr.mxu0 0.0
        %593 = vmatpush1.msra.mxu0 1.0
        %594 = vmatprep.subr.mxu0 0.0
        %595 = vmatpush1.msra.mxu0 1.0
        %596 = vmatprep.subr.mxu0 0.0
        %597 = vmatpush1.msra.mxu0 1.0
        %598 = vmatprep.subr.mxu0 0.0
        %599 = vmatpush1.msra.mxu0 1.0
        %600 = vmatprep.subr.mxu0 0.0
        %601 = vmatpush1.msra.mxu0 1.0
        %602 = vmatprep.subr.mxu0 0.0
        %603 = vmatpush2.msra.mxu0 1.0
        %604 = vmatprep.subr.mxu0 0.0
        %605 = vmatpush2.msra.mxu0 1.0
        %606 = vmatprep.subr.mxu0 0.0
        %607 = vmatpush2.msra.mxu0 1.0
        %608 = vmatprep.subr.mxu0 0.0
        %609 = vmatpush2.msra.mxu0 1.0
        %610 = vmatprep.subr.mxu0 0.0
        %611 = vmatpush2.msra.mxu0 1.0
        %612 = vmatprep.subr.mxu0 0.0
        %613 = vmatpush2.msra.mxu0 1.0
        %614 = vmatprep.subr.mxu0 0.0
        %615 = vmatpush2.msra.mxu0 1.0
        %616 = vmatprep.subr.mxu0 0.0
        %617 = vmatpush2.msra.mxu0 1.0
        %618 = vmatprep.subr.mxu0 0.0
        %619 = vmatpush2.msra.mxu0 1.0
        %620 = vmatprep.subr.mxu0 0.0
        %621 = vmatpush2.msra.mxu0 1.0
        %622 = vmatprep.subr.mxu0 0.0
        %623 = vmatpush2.msra.mxu0 1.0
        %624 = vmatprep.subr.mxu0 0.0
        %625 = vmatpush2.msra.mxu0 1.0
        %626 = vmatprep.subr.mxu0 0.0
        %627 = vmatpush2.msra.mxu0 1.0
        %628 = vmatprep.subr.mxu0 0.0
        %629 = vmatpush2.msra.mxu0 1.0
        %630 = vmatprep.subr.mxu0 0.0
        %631 = vmatpush2.msra.mxu0 1.0
        %632 = vmatprep.subr.mxu0 0.0
        %633 = vmatpush2.msra.mxu0 1.0
        %v634 = vand.u32 %v244, 4294901760
        %v635 = vsub.f32 %v244, %v634
        %v636 = vand.u32 %v635, 4294901760
        %637 = vmatprep.mubr.f32.mxu0 %v636
        %v638 = vand.u32 %v243, 4294901760
        %v639 = vsub.f32 %v243, %v638
        %v640 = vand.u32 %v639, 4294901760
        %641 = vmatmul.mubr.f32.gmra.mxu0 %v640
        %v642 = vpop.f32.mrf.mxu0
        %v643 = vadd.f32 %v540, %v642
        %v644 = vpop.f32.mrf.mxu0
        %v645 = vand.u32 %v246, 4294901760
        %v646 = vsub.f32 %v246, %v645
        %v647 = vand.u32 %v646, 4294901760
        %648 = vmatprep.mubr.f32.mxu0 %v647
        %v649 = vand.u32 %v245, 4294901760
        %v650 = vsub.f32 %v245, %v649
        %v651 = vand.u32 %v650, 4294901760
        %652 = vmatmul.mubr.f32.gmra.mxu0 %v651
        %v653 = vpop.f32.mrf.mxu0
        %v654 = vadd.f32 %v549, %v653
        %v655 = vpop.f32.mrf.mxu0
        %v656 = vand.u32 %v248, 4294901760
        %v657 = vsub.f32 %v248, %v656
        %v658 = vand.u32 %v657, 4294901760
        %659 = vmatprep.mubr.f32.mxu0 %v658
        %v660 = vand.u32 %v247, 4294901760
        %v661 = vsub.f32 %v247, %v660
        %v662 = vand.u32 %v661, 4294901760
        %663 = vmatmul.mubr.f32.gmra.mxu0 %v662
        %v664 = vpop.f32.mrf.mxu0
        %v665 = vadd.f32 %v558, %v664
        %v666 = vpop.f32.mrf.mxu0
        %v667 = vand.u32 %v250, 4294901760
        %v668 = vsub.f32 %v250, %v667
        %v669 = vand.u32 %v668, 4294901760
        %670 = vmatprep.mubr.f32.mxu0 %v669
        %v671 = vand.u32 %v249, 4294901760
        %v672 = vsub.f32 %v249, %v671
        %v673 = vand.u32 %v672, 4294901760
        %674 = vmatmul.mubr.f32.gmra.mxu0 %v673
        %v675 = vpop.f32.mrf.mxu0
        %v676 = vadd.f32 %v567, %v675
        %v677 = vpop.f32.mrf.mxu0
        %678 = vdwg.mxu0
        %679 = vmatprep.subr.mxu0 0.0
        %680 = vmatpush1.msra.mxu0 0.0
        %681 = vmatprep.subr.mxu0 0.0
        %682 = vmatpush1.msra.mxu0 0.0
        %683 = vmatprep.subr.mxu0 0.0
        %684 = vmatpush1.msra.mxu0 0.0
        %685 = vmatprep.subr.mxu0 0.0
        %686 = vmatpush1.msra.mxu0 0.0
        %687 = vmatprep.subr.mxu0 0.0
        %688 = vmatpush1.msra.mxu0 0.0
        %689 = vmatprep.subr.mxu0 0.0
        %690 = vmatpush1.msra.mxu0 0.0
        %691 = vmatprep.subr.mxu0 0.0
        %692 = vmatpush1.msra.mxu0 0.0
        %693 = vmatprep.subr.mxu0 0.0
        %694 = vmatpush1.msra.mxu0 0.0
        %695 = vmatprep.subr.mxu0 0.0
        %696 = vmatpush1.msra.mxu0 0.0
        %697 = vmatprep.subr.mxu0 0.0
        %698 = vmatpush1.msra.mxu0 0.0
        %699 = vmatprep.subr.mxu0 0.0
        %700 = vmatpush1.msra.mxu0 0.0
        %701 = vmatprep.subr.mxu0 0.0
        %702 = vmatpush1.msra.mxu0 0.0
        %703 = vmatprep.subr.mxu0 0.0
        %704 = vmatpush1.msra.mxu0 0.0
        %705 = vmatprep.subr.mxu0 0.0
        %706 = vmatpush1.msra.mxu0 0.0
        %707 = vmatprep.subr.mxu0 0.0
        %708 = vmatpush1.msra.mxu0 0.0
        %709 = vmatprep.subr.mxu0 0.0
        %710 = vmatpush1.msra.mxu0 0.0
        %711 = vmatprep.subr.mxu0 0.0
        %712 = vmatpush2.msra.mxu0 0.0
        %713 = vmatprep.subr.mxu0 0.0
        %714 = vmatpush2.msra.mxu0 0.0
        %715 = vmatprep.subr.mxu0 0.0
        %716 = vmatpush2.msra.mxu0 0.0
        %717 = vmatprep.subr.mxu0 0.0
        %718 = vmatpush2.msra.mxu0 0.0
        %719 = vmatprep.subr.mxu0 0.0
        %720 = vmatpush2.msra.mxu0 0.0
        %721 = vmatprep.subr.mxu0 0.0
        %722 = vmatpush2.msra.mxu0 0.0
        %723 = vmatprep.subr.mxu0 0.0
        %724 = vmatpush2.msra.mxu0 0.0
        %725 = vmatprep.subr.mxu0 0.0
        %726 = vmatpush2.msra.mxu0 0.0
        %727 = vmatprep.subr.mxu0 0.0
        %728 = vmatpush2.msra.mxu0 0.0
        %729 = vmatprep.subr.mxu0 0.0
        %730 = vmatpush2.msra.mxu0 0.0
        %731 = vmatprep.subr.mxu0 0.0
        %732 = vmatpush2.msra.mxu0 0.0
        %733 = vmatprep.subr.mxu0 0.0
        %734 = vmatpush2.msra.mxu0 0.0
        %735 = vmatprep.subr.mxu0 0.0
        %736 = vmatpush2.msra.mxu0 0.0
        %737 = vmatprep.subr.mxu0 0.0
        %738 = vmatpush2.msra.mxu0 0.0
        %739 = vmatprep.subr.mxu0 0.0
        %740 = vmatpush2.msra.mxu0 0.0
        %741 = vmatprep.subr.mxu0 0.0
        %742 = vmatpush2.msra.mxu0 0.0
        %v743 = vand.u32 %v244, 4294901760
        %744 = vmatprep.mubr.f32.mxu0 %v743
        %v745 = vand.u32 %v243, 4294901760
        %746 = vmatmul.mubr.f32.gmra.mxu0 %v745
        %v747 = vpop.f32.mrf.mxu0
        %v748 = vadd.f32 %v643, %v747
        %v749 = vpop.f32.mrf.mxu0
        %v750 = vand.u32 %v246, 4294901760
        %751 = vmatprep.mubr.f32.mxu0 %v750
        %v752 = vand.u32 %v245, 4294901760
        %753 = vmatmul.mubr.f32.gmra.mxu0 %v752
        %v754 = vpop.f32.mrf.mxu0
        %v755 = vadd.f32 %v654, %v754
        %v756 = vpop.f32.mrf.mxu0
        %v757 = vand.u32 %v248, 4294901760
        %758 = vmatprep.mubr.f32.mxu0 %v757
        %v759 = vand.u32 %v247, 4294901760
        %760 = vmatmul.mubr.f32.gmra.mxu0 %v759
        %v761 = vpop.f32.mrf.mxu0
        %v762 = vadd.f32 %v665, %v761
        %v763 = vpop.f32.mrf.mxu0
        %v764 = vand.u32 %v250, 4294901760
        %765 = vmatprep.mubr.f32.mxu0 %v764
        %v766 = vand.u32 %v249, 4294901760
        %767 = vmatmul.mubr.f32.gmra.mxu0 %v766
        %v768 = vpop.f32.mrf.mxu0
        %v769 = vadd.f32 %v676, %v768
        %v770 = vpop.f32.mrf.mxu0
        %771 = vdwg.mxu0
        %772 = vmatprep.subr.mxu0 0.0
        %773 = vmatpush1.msra.mxu0 1.0
        %774 = vmatprep.subr.mxu0 0.0
        %775 = vmatpush1.msra.mxu0 1.0
        %776 = vmatprep.subr.mxu0 0.0
        %777 = vmatpush1.msra.mxu0 1.0
        %778 = vmatprep.subr.mxu0 0.0
        %779 = vmatpush1.msra.mxu0 1.0
        %780 = vmatprep.subr.mxu0 0.0
        %781 = vmatpush1.msra.mxu0 1.0
        %782 = vmatprep.subr.mxu0 0.0
        %783 = vmatpush1.msra.mxu0 1.0
        %784 = vmatprep.subr.mxu0 0.0
        %785 = vmatpush1.msra.mxu0 1.0
        %786 = vmatprep.subr.mxu0 0.0
        %787 = vmatpush1.msra.mxu0 1.0
        %788 = vmatprep.subr.mxu0 0.0
        %789 = vmatpush1.msra.mxu0 1.0
        %790 = vmatprep.subr.mxu0 0.0
        %791 = vmatpush1.msra.mxu0 1.0
        %792 = vmatprep.subr.mxu0 0.0
        %793 = vmatpush1.msra.mxu0 1.0
        %794 = vmatprep.subr.mxu0 0.0
        %795 = vmatpush1.msra.mxu0 1.0
        %796 = vmatprep.subr.mxu0 0.0
        %797 = vmatpush1.msra.mxu0 1.0
        %798 = vmatprep.subr.mxu0 0.0
        %799 = vmatpush1.msra.mxu0 1.0
        %800 = vmatprep.subr.mxu0 0.0
        %801 = vmatpush1.msra.mxu0 1.0
        %802 = vmatprep.subr.mxu0 0.0
        %803 = vmatpush1.msra.mxu0 1.0
        %804 = vmatprep.subr.mxu0 0.0
        %805 = vmatpush2.msra.mxu0 1.0
        %806 = vmatprep.subr.mxu0 0.0
        %807 = vmatpush2.msra.mxu0 1.0
        %808 = vmatprep.subr.mxu0 0.0
        %809 = vmatpush2.msra.mxu0 1.0
        %810 = vmatprep.subr.mxu0 0.0
        %811 = vmatpush2.msra.mxu0 1.0
        %812 = vmatprep.subr.mxu0 0.0
        %813 = vmatpush2.msra.mxu0 1.0
        %814 = vmatprep.subr.mxu0 0.0
        %815 = vmatpush2.msra.mxu0 1.0
        %816 = vmatprep.subr.mxu0 0.0
        %817 = vmatpush2.msra.mxu0 1.0
        %818 = vmatprep.subr.mxu0 0.0
        %819 = vmatpush2.msra.mxu0 1.0
        %820 = vmatprep.subr.mxu0 0.0
        %821 = vmatpush2.msra.mxu0 1.0
        %822 = vmatprep.subr.mxu0 0.0
        %823 = vmatpush2.msra.mxu0 1.0
        %824 = vmatprep.subr.mxu0 0.0
        %825 = vmatpush2.msra.mxu0 1.0
        %826 = vmatprep.subr.mxu0 0.0
        %827 = vmatpush2.msra.mxu0 1.0
        %828 = vmatprep.subr.mxu0 0.0
        %829 = vmatpush2.msra.mxu0 1.0
        %830 = vmatprep.subr.mxu0 0.0
        %831 = vmatpush2.msra.mxu0 1.0
        %832 = vmatprep.subr.mxu0 0.0
        %833 = vmatpush2.msra.mxu0 1.0
        %834 = vmatprep.subr.mxu0 0.0
        %835 = vmatpush2.msra.mxu0 1.0
        %v836 = vand.u32 %v244, 4294901760
        %837 = vmatprep.mubr.f32.mxu0 %v836
        %v838 = vand.u32 %v243, 4294901760
        %839 = vmatmul.mubr.f32.gmra.mxu0 %v838
        %v840 = vpop.f32.mrf.mxu0
        %v841 = vadd.f32 %v748, %v840
        %v842 = vpop.f32.mrf.mxu0
        %v843 = vand.u32 %v246, 4294901760
        %844 = vmatprep.mubr.f32.mxu0 %v843
        %v845 = vand.u32 %v245, 4294901760
        %846 = vmatmul.mubr.f32.gmra.mxu0 %v845
        %v847 = vpop.f32.mrf.mxu0
        %v848 = vadd.f32 %v755, %v847
        %v849 = vpop.f32.mrf.mxu0
        %v850 = vand.u32 %v248, 4294901760
        %851 = vmatprep.mubr.f32.mxu0 %v850
        %v852 = vand.u32 %v247, 4294901760
        %853 = vmatmul.mubr.f32.gmra.mxu0 %v852
        %v854 = vpop.f32.mrf.mxu0
        %v855 = vadd.f32 %v762, %v854
        %v856 = vpop.f32.mrf.mxu0
        %v857 = vand.u32 %v250, 4294901760
        %858 = vmatprep.mubr.f32.mxu0 %v857
        %v859 = vand.u32 %v249, 4294901760
        %860 = vmatmul.mubr.f32.gmra.mxu0 %v859
        %v861 = vpop.f32.mrf.mxu0
        %v862 = vadd.f32 %v769, %v861
        %v863 = vpop.f32.mrf.mxu0
        %864 = vdwg.mxu0
        %v865 = vmul.f32 %v841, 0.00390625
        %v866 = vmul.f32 %v848, 0.00390625
        %v867 = vmul.f32 %v855, 0.00390625
        %v868 = vmul.f32 %v862, 0.00390625
        %v869 = vld [vmem:[%s1] sm:$0x3]
        %v870 = vld [vmem:[%s2] sm:$0x3]
        %vm871 = vcmask 261120
        %v873 = vsel %vm871, %v869, 0
        %875 = vmatprep.subr.mxu0 0.0
        %876 = vmatpush1.msra.mxu0 0.0
        %877 = vmatprep.subr.mxu0 0.0
        %878 = vmatpush1.msra.mxu0 0.0
        %879 = vmatprep.subr.mxu0 0.0
        %880 = vmatpush1.msra.mxu0 0.0
        %881 = vmatprep.subr.mxu0 0.0
        %882 = vmatpush1.msra.mxu0 0.0
        %883 = vmatprep.subr.mxu0 0.0
        %884 = vmatpush1.msra.mxu0 0.0
        %885 = vmatprep.subr.mxu0 0.0
        %886 = vmatpush1.msra.mxu0 0.0
        %887 = vmatprep.subr.mxu0 0.0
        %888 = vmatpush1.msra.mxu0 0.0
        %889 = vmatprep.subr.mxu0 0.0
        %890 = vmatpush1.msra.mxu0 0.0
        %891 = vmatprep.subr.mxu0 0.0
        %892 = vmatpush1.msra.mxu0 0.0
        %893 = vmatprep.subr.mxu0 0.0
        %894 = vmatpush1.msra.mxu0 0.0
        %895 = vmatprep.subr.mxu0 0.0
        %896 = vmatpush1.msra.mxu0 0.0
        %897 = vmatprep.subr.mxu0 0.0
        %898 = vmatpush1.msra.mxu0 0.0
        %899 = vmatprep.subr.mxu0 0.0
        %v900 = vand.u32 %v868, 4294901760
        %901 = vmatpush1.msra.mxu0 %v900
        %902 = vmatprep.subr.mxu0 0.0
        %v903 = vand.u32 %v867, 4294901760
        %904 = vmatpush1.msra.mxu0 %v903
        %905 = vmatprep.subr.mxu0 0.0
        %v906 = vand.u32 %v866, 4294901760
        %907 = vmatpush1.msra.mxu0 %v906
        %908 = vmatprep.subr.mxu0 0.0
        %v909 = vand.u32 %v865, 4294901760
        %910 = vmatpush1.msra.mxu0 %v909
        %911 = vmatprep.subr.mxu0 0.0
        %912 = vmatpush2.msra.mxu0 0.0
        %913 = vmatprep.subr.mxu0 0.0
        %914 = vmatpush2.msra.mxu0 0.0
        %915 = vmatprep.subr.mxu0 0.0
        %916 = vmatpush2.msra.mxu0 0.0
        %917 = vmatprep.subr.mxu0 0.0
        %918 = vmatpush2.msra.mxu0 0.0
        %919 = vmatprep.subr.mxu0 0.0
        %920 = vmatpush2.msra.mxu0 0.0
        %921 = vmatprep.subr.mxu0 0.0
        %922 = vmatpush2.msra.mxu0 0.0
        %923 = vmatprep.subr.mxu0 0.0
        %924 = vmatpush2.msra.mxu0 0.0
        %925 = vmatprep.subr.mxu0 0.0
        %926 = vmatpush2.msra.mxu0 0.0
        %927 = vmatprep.subr.mxu0 0.0
        %928 = vmatpush2.msra.mxu0 0.0
        %929 = vmatprep.subr.mxu0 0.0
        %930 = vmatpush2.msra.mxu0 0.0
        %931 = vmatprep.subr.mxu0 0.0
        %932 = vmatpush2.msra.mxu0 0.0
        %933 = vmatprep.subr.mxu0 0.0
        %934 = vmatpush2.msra.mxu0 0.0
        %935 = vmatprep.subr.mxu0 0.0
        %936 = vmatpush2.msra.mxu0 0.0
        %937 = vmatprep.subr.mxu0 0.0
        %938 = vmatpush2.msra.mxu0 0.0
        %939 = vmatprep.subr.mxu0 0.0
        %940 = vmatpush2.msra.mxu0 0.0
        %941 = vmatprep.subr.mxu0 0.0
        %942 = vmatpush2.msra.mxu0 0.0
        %943 = vmatprep.mubr.f32.mxu0 0.0
        %v944 = vand.u32 %v873, 4294901760
        %v945 = vsub.f32 %v873, %v944
        %v946 = vand.u32 %v945, 4294901760
        %v947 = vsub.f32 %v945, %v946
        %v948 = vand.u32 %v947, 4294901760
        %949 = vmatmul.mubr.f32.gmra.mxu0 %v948
        %v950 = vpop.f32.mrf.mxu0
        %v951 = vadd.f32 %v870, %v950
        %v952 = vpop.f32.mrf.mxu0
        %953 = vdwg.mxu0
        %954 = vmatprep.subr.mxu0 0.0
        %955 = vmatpush1.msra.mxu0 0.0
        %956 = vmatprep.subr.mxu0 0.0
        %957 = vmatpush1.msra.mxu0 0.0
        %958 = vmatprep.subr.mxu0 0.0
        %959 = vmatpush1.msra.mxu0 0.0
        %960 = vmatprep.subr.mxu0 0.0
        %961 = vmatpush1.msra.mxu0 0.0
        %962 = vmatprep.subr.mxu0 0.0
        %963 = vmatpush1.msra.mxu0 0.0
        %964 = vmatprep.subr.mxu0 0.0
        %965 = vmatpush1.msra.mxu0 0.0
        %966 = vmatprep.subr.mxu0 0.0
        %967 = vmatpush1.msra.mxu0 0.0
        %968 = vmatprep.subr.mxu0 0.0
        %969 = vmatpush1.msra.mxu0 0.0
        %970 = vmatprep.subr.mxu0 0.0
        %971 = vmatpush1.msra.mxu0 0.0
        %972 = vmatprep.subr.mxu0 0.0
        %973 = vmatpush1.msra.mxu0 0.0
        %974 = vmatprep.subr.mxu0 0.0
        %975 = vmatpush1.msra.mxu0 0.0
        %976 = vmatprep.subr.mxu0 0.0
        %977 = vmatpush1.msra.mxu0 0.0
        %978 = vmatprep.subr.mxu0 0.0
        %v979 = vand.u32 %v868, 4294901760
        %v980 = vsub.f32 %v868, %v979
        %v981 = vand.u32 %v980, 4294901760
        %v982 = vsub.f32 %v980, %v981
        %v983 = vand.u32 %v982, 4294901760
        %984 = vmatpush1.msra.mxu0 %v983
        %985 = vmatprep.subr.mxu0 0.0
        %v986 = vand.u32 %v867, 4294901760
        %v987 = vsub.f32 %v867, %v986
        %v988 = vand.u32 %v987, 4294901760
        %v989 = vsub.f32 %v987, %v988
        %v990 = vand.u32 %v989, 4294901760
        %991 = vmatpush1.msra.mxu0 %v990
        %992 = vmatprep.subr.mxu0 0.0
        %v993 = vand.u32 %v866, 4294901760
        %v994 = vsub.f32 %v866, %v993
        %v995 = vand.u32 %v994, 4294901760
        %v996 = vsub.f32 %v994, %v995
        %v997 = vand.u32 %v996, 4294901760
        %998 = vmatpush1.msra.mxu0 %v997
        %999 = vmatprep.subr.mxu0 0.0
        %v1000 = vand.u32 %v865, 4294901760
        %v1001 = vsub.f32 %v865, %v1000
        %v1002 = vand.u32 %v1001, 4294901760
        %v1003 = vsub.f32 %v1001, %v1002
        %v1004 = vand.u32 %v1003, 4294901760
        %1005 = vmatpush1.msra.mxu0 %v1004
        %1006 = vmatprep.subr.mxu0 0.0
        %1007 = vmatpush2.msra.mxu0 0.0
        %1008 = vmatprep.subr.mxu0 0.0
        %1009 = vmatpush2.msra.mxu0 0.0
        %1010 = vmatprep.subr.mxu0 0.0
        %1011 = vmatpush2.msra.mxu0 0.0
        %1012 = vmatprep.subr.mxu0 0.0
        %1013 = vmatpush2.msra.mxu0 0.0
        %1014 = vmatprep.subr.mxu0 0.0
        %1015 = vmatpush2.msra.mxu0 0.0
        %1016 = vmatprep.subr.mxu0 0.0
        %1017 = vmatpush2.msra.mxu0 0.0
        %1018 = vmatprep.subr.mxu0 0.0
        %1019 = vmatpush2.msra.mxu0 0.0
        %1020 = vmatprep.subr.mxu0 0.0
        %1021 = vmatpush2.msra.mxu0 0.0
        %1022 = vmatprep.subr.mxu0 0.0
        %1023 = vmatpush2.msra.mxu0 0.0
        %1024 = vmatprep.subr.mxu0 0.0
        %1025 = vmatpush2.msra.mxu0 0.0
        %1026 = vmatprep.subr.mxu0 0.0
        %1027 = vmatpush2.msra.mxu0 0.0
        %1028 = vmatprep.subr.mxu0 0.0
        %1029 = vmatpush2.msra.mxu0 0.0
        %1030 = vmatprep.subr.mxu0 0.0
        %1031 = vmatpush2.msra.mxu0 0.0
        %1032 = vmatprep.subr.mxu0 0.0
        %1033 = vmatpush2.msra.mxu0 0.0
        %1034 = vmatprep.subr.mxu0 0.0
        %1035 = vmatpush2.msra.mxu0 0.0
        %1036 = vmatprep.subr.mxu0 0.0
        %1037 = vmatpush2.msra.mxu0 0.0
        %1038 = vmatprep.mubr.f32.mxu0 0.0
        %v1039 = vand.u32 %v873, 4294901760
        %1040 = vmatmul.mubr.f32.gmra.mxu0 %v1039
        %v1041 = vpop.f32.mrf.mxu0
        %v1042 = vadd.f32 %v951, %v1041
        %v1043 = vpop.f32.mrf.mxu0
        %1044 = vdwg.mxu0
        %1045 = vmatprep.subr.mxu0 0.0
        %1046 = vmatpush1.msra.mxu0 0.0
        %1047 = vmatprep.subr.mxu0 0.0
        %1048 = vmatpush1.msra.mxu0 0.0
        %1049 = vmatprep.subr.mxu0 0.0
        %1050 = vmatpush1.msra.mxu0 0.0
        %1051 = vmatprep.subr.mxu0 0.0
        %1052 = vmatpush1.msra.mxu0 0.0
        %1053 = vmatprep.subr.mxu0 0.0
        %1054 = vmatpush1.msra.mxu0 0.0
        %1055 = vmatprep.subr.mxu0 0.0
        %1056 = vmatpush1.msra.mxu0 0.0
        %1057 = vmatprep.subr.mxu0 0.0
        %1058 = vmatpush1.msra.mxu0 0.0
        %1059 = vmatprep.subr.mxu0 0.0
        %1060 = vmatpush1.msra.mxu0 0.0
        %1061 = vmatprep.subr.mxu0 0.0
        %1062 = vmatpush1.msra.mxu0 0.0
        %1063 = vmatprep.subr.mxu0 0.0
        %1064 = vmatpush1.msra.mxu0 0.0
        %1065 = vmatprep.subr.mxu0 0.0
        %1066 = vmatpush1.msra.mxu0 0.0
        %1067 = vmatprep.subr.mxu0 0.0
        %1068 = vmatpush1.msra.mxu0 0.0
        %1069 = vmatprep.subr.mxu0 0.0
        %v1070 = vand.u32 %v868, 4294901760
        %v1071 = vsub.f32 %v868, %v1070
        %1072 = vmatpush1.msra.mxu0 %v1071
        %1073 = vmatprep.subr.mxu0 0.0
        %v1074 = vand.u32 %v867, 4294901760
        %v1075 = vsub.f32 %v867, %v1074
        %1076 = vmatpush1.msra.mxu0 %v1075
        %1077 = vmatprep.subr.mxu0 0.0
        %v1078 = vand.u32 %v866, 4294901760
        %v1079 = vsub.f32 %v866, %v1078
        %1080 = vmatpush1.msra.mxu0 %v1079
        %1081 = vmatprep.subr.mxu0 0.0
        %v1082 = vand.u32 %v865, 4294901760
        %v1083 = vsub.f32 %v865, %v1082
        %1084 = vmatpush1.msra.mxu0 %v1083
        %1085 = vmatprep.subr.mxu0 0.0
        %1086 = vmatpush2.msra.mxu0 0.0
        %1087 = vmatprep.subr.mxu0 0.0
        %1088 = vmatpush2.msra.mxu0 0.0
        %1089 = vmatprep.subr.mxu0 0.0
        %1090 = vmatpush2.msra.mxu0 0.0
        %1091 = vmatprep.subr.mxu0 0.0
        %1092 = vmatpush2.msra.mxu0 0.0
        %1093 = vmatprep.subr.mxu0 0.0
        %1094 = vmatpush2.msra.mxu0 0.0
        %1095 = vmatprep.subr.mxu0 0.0
        %1096 = vmatpush2.msra.mxu0 0.0
        %1097 = vmatprep.subr.mxu0 0.0
        %1098 = vmatpush2.msra.mxu0 0.0
        %1099 = vmatprep.subr.mxu0 0.0
        %1100 = vmatpush2.msra.mxu0 0.0
        %1101 = vmatprep.subr.mxu0 0.0
        %1102 = vmatpush2.msra.mxu0 0.0
        %1103 = vmatprep.subr.mxu0 0.0
        %1104 = vmatpush2.msra.mxu0 0.0
        %1105 = vmatprep.subr.mxu0 0.0
        %1106 = vmatpush2.msra.mxu0 0.0
        %1107 = vmatprep.subr.mxu0 0.0
        %1108 = vmatpush2.msra.mxu0 0.0
        %1109 = vmatprep.subr.mxu0 0.0
        %1110 = vmatpush2.msra.mxu0 0.0
        %1111 = vmatprep.subr.mxu0 0.0
        %1112 = vmatpush2.msra.mxu0 0.0
        %1113 = vmatprep.subr.mxu0 0.0
        %1114 = vmatpush2.msra.mxu0 0.0
        %1115 = vmatprep.subr.mxu0 0.0
        %1116 = vmatpush2.msra.mxu0 0.0
        %1117 = vmatprep.mubr.f32.mxu0 0.0
        %v1118 = vand.u32 %v873, 4294901760
        %v1119 = vsub.f32 %v873, %v1118
        %1120 = vmatmul.mubr.f32.gmra.mxu0 %v1119
        %v1121 = vpop.f32.mrf.mxu0
        %v1122 = vadd.f32 %v1042, %v1121
        %v1123 = vpop.f32.mrf.mxu0
        %1124 = vdwg.mxu0
        %1125 = vmatprep.subr.mxu0 0.0
        %1126 = vmatpush1.msra.mxu0 0.0
        %1127 = vmatprep.subr.mxu0 0.0
        %1128 = vmatpush1.msra.mxu0 0.0
        %1129 = vmatprep.subr.mxu0 0.0
        %1130 = vmatpush1.msra.mxu0 0.0
        %1131 = vmatprep.subr.mxu0 0.0
        %1132 = vmatpush1.msra.mxu0 0.0
        %1133 = vmatprep.subr.mxu0 0.0
        %1134 = vmatpush1.msra.mxu0 0.0
        %1135 = vmatprep.subr.mxu0 0.0
        %1136 = vmatpush1.msra.mxu0 0.0
        %1137 = vmatprep.subr.mxu0 0.0
        %1138 = vmatpush1.msra.mxu0 0.0
        %1139 = vmatprep.subr.mxu0 0.0
        %1140 = vmatpush1.msra.mxu0 0.0
        %1141 = vmatprep.subr.mxu0 0.0
        %1142 = vmatpush1.msra.mxu0 0.0
        %1143 = vmatprep.subr.mxu0 0.0
        %1144 = vmatpush1.msra.mxu0 0.0
        %1145 = vmatprep.subr.mxu0 0.0
        %1146 = vmatpush1.msra.mxu0 0.0
        %1147 = vmatprep.subr.mxu0 0.0
        %1148 = vmatpush1.msra.mxu0 0.0
        %1149 = vmatprep.subr.mxu0 0.0
        %v1150 = vand.u32 %v868, 4294901760
        %1151 = vmatpush1.msra.mxu0 %v1150
        %1152 = vmatprep.subr.mxu0 0.0
        %v1153 = vand.u32 %v867, 4294901760
        %1154 = vmatpush1.msra.mxu0 %v1153
        %1155 = vmatprep.subr.mxu0 0.0
        %v1156 = vand.u32 %v866, 4294901760
        %1157 = vmatpush1.msra.mxu0 %v1156
        %1158 = vmatprep.subr.mxu0 0.0
        %v1159 = vand.u32 %v865, 4294901760
        %1160 = vmatpush1.msra.mxu0 %v1159
        %1161 = vmatprep.subr.mxu0 0.0
        %1162 = vmatpush2.msra.mxu0 0.0
        %1163 = vmatprep.subr.mxu0 0.0
        %1164 = vmatpush2.msra.mxu0 0.0
        %1165 = vmatprep.subr.mxu0 0.0
        %1166 = vmatpush2.msra.mxu0 0.0
        %1167 = vmatprep.subr.mxu0 0.0
        %1168 = vmatpush2.msra.mxu0 0.0
        %1169 = vmatprep.subr.mxu0 0.0
        %1170 = vmatpush2.msra.mxu0 0.0
        %1171 = vmatprep.subr.mxu0 0.0
        %1172 = vmatpush2.msra.mxu0 0.0
        %1173 = vmatprep.subr.mxu0 0.0
        %1174 = vmatpush2.msra.mxu0 0.0
        %1175 = vmatprep.subr.mxu0 0.0
        %1176 = vmatpush2.msra.mxu0 0.0
        %1177 = vmatprep.subr.mxu0 0.0
        %1178 = vmatpush2.msra.mxu0 0.0
        %1179 = vmatprep.subr.mxu0 0.0
        %1180 = vmatpush2.msra.mxu0 0.0
        %1181 = vmatprep.subr.mxu0 0.0
        %1182 = vmatpush2.msra.mxu0 0.0
        %1183 = vmatprep.subr.mxu0 0.0
        %1184 = vmatpush2.msra.mxu0 0.0
        %1185 = vmatprep.subr.mxu0 0.0
        %1186 = vmatpush2.msra.mxu0 0.0
        %1187 = vmatprep.subr.mxu0 0.0
        %1188 = vmatpush2.msra.mxu0 0.0
        %1189 = vmatprep.subr.mxu0 0.0
        %1190 = vmatpush2.msra.mxu0 0.0
        %1191 = vmatprep.subr.mxu0 0.0
        %1192 = vmatpush2.msra.mxu0 0.0
        %1193 = vmatprep.mubr.f32.mxu0 0.0
        %v1194 = vand.u32 %v873, 4294901760
        %v1195 = vsub.f32 %v873, %v1194
        %v1196 = vand.u32 %v1195, 4294901760
        %1197 = vmatmul.mubr.f32.gmra.mxu0 %v1196
        %v1198 = vpop.f32.mrf.mxu0
        %v1199 = vadd.f32 %v1122, %v1198
        %v1200 = vpop.f32.mrf.mxu0
        %1201 = vdwg.mxu0
        %1202 = vmatprep.subr.mxu0 0.0
        %1203 = vmatpush1.msra.mxu0 0.0
        %1204 = vmatprep.subr.mxu0 0.0
        %1205 = vmatpush1.msra.mxu0 0.0
        %1206 = vmatprep.subr.mxu0 0.0
        %1207 = vmatpush1.msra.mxu0 0.0
        %1208 = vmatprep.subr.mxu0 0.0
        %1209 = vmatpush1.msra.mxu0 0.0
        %1210 = vmatprep.subr.mxu0 0.0
        %1211 = vmatpush1.msra.mxu0 0.0
        %1212 = vmatprep.subr.mxu0 0.0
        %1213 = vmatpush1.msra.mxu0 0.0
        %1214 = vmatprep.subr.mxu0 0.0
        %1215 = vmatpush1.msra.mxu0 0.0
        %1216 = vmatprep.subr.mxu0 0.0
        %1217 = vmatpush1.msra.mxu0 0.0
        %1218 = vmatprep.subr.mxu0 0.0
        %1219 = vmatpush1.msra.mxu0 0.0
        %1220 = vmatprep.subr.mxu0 0.0
        %1221 = vmatpush1.msra.mxu0 0.0
        %1222 = vmatprep.subr.mxu0 0.0
        %1223 = vmatpush1.msra.mxu0 0.0
        %1224 = vmatprep.subr.mxu0 0.0
        %1225 = vmatpush1.msra.mxu0 0.0
        %1226 = vmatprep.subr.mxu0 0.0
        %v1227 = vand.u32 %v868, 4294901760
        %v1228 = vsub.f32 %v868, %v1227
        %v1229 = vand.u32 %v1228, 4294901760
        %1230 = vmatpush1.msra.mxu0 %v1229
        %1231 = vmatprep.subr.mxu0 0.0
        %v1232 = vand.u32 %v867, 4294901760
        %v1233 = vsub.f32 %v867, %v1232
        %v1234 = vand.u32 %v1233, 4294901760
        %1235 = vmatpush1.msra.mxu0 %v1234
        %1236 = vmatprep.subr.mxu0 0.0
        %v1237 = vand.u32 %v866, 4294901760
        %v1238 = vsub.f32 %v866, %v1237
        %v1239 = vand.u32 %v1238, 4294901760
        %1240 = vmatpush1.msra.mxu0 %v1239
        %1241 = vmatprep.subr.mxu0 0.0
        %v1242 = vand.u32 %v865, 4294901760
        %v1243 = vsub.f32 %v865, %v1242
        %v1244 = vand.u32 %v1243, 4294901760
        %1245 = vmatpush1.msra.mxu0 %v1244
        %1246 = vmatprep.subr.mxu0 0.0
        %1247 = vmatpush2.msra.mxu0 0.0
        %1248 = vmatprep.subr.mxu0 0.0
        %1249 = vmatpush2.msra.mxu0 0.0
        %1250 = vmatprep.subr.mxu0 0.0
        %1251 = vmatpush2.msra.mxu0 0.0
        %1252 = vmatprep.subr.mxu0 0.0
        %1253 = vmatpush2.msra.mxu0 0.0
        %1254 = vmatprep.subr.mxu0 0.0
        %1255 = vmatpush2.msra.mxu0 0.0
        %1256 = vmatprep.subr.mxu0 0.0
        %1257 = vmatpush2.msra.mxu0 0.0
        %1258 = vmatprep.subr.mxu0 0.0
        %1259 = vmatpush2.msra.mxu0 0.0
        %1260 = vmatprep.subr.mxu0 0.0
        %1261 = vmatpush2.msra.mxu0 0.0
        %1262 = vmatprep.subr.mxu0 0.0
        %1263 = vmatpush2.msra.mxu0 0.0
        %1264 = vmatprep.subr.mxu0 0.0
        %1265 = vmatpush2.msra.mxu0 0.0
        %1266 = vmatprep.subr.mxu0 0.0
        %1267 = vmatpush2.msra.mxu0 0.0
        %1268 = vmatprep.subr.mxu0 0.0
        %1269 = vmatpush2.msra.mxu0 0.0
        %1270 = vmatprep.subr.mxu0 0.0
        %1271 = vmatpush2.msra.mxu0 0.0
        %1272 = vmatprep.subr.mxu0 0.0
        %1273 = vmatpush2.msra.mxu0 0.0
        %1274 = vmatprep.subr.mxu0 0.0
        %1275 = vmatpush2.msra.mxu0 0.0
        %1276 = vmatprep.subr.mxu0 0.0
        %1277 = vmatpush2.msra.mxu0 0.0
        %1278 = vmatprep.mubr.f32.mxu0 0.0
        %v1279 = vand.u32 %v873, 4294901760
        %1280 = vmatmul.mubr.f32.gmra.mxu0 %v1279
        %v1281 = vpop.f32.mrf.mxu0
        %v1282 = vadd.f32 %v1199, %v1281
        %v1283 = vpop.f32.mrf.mxu0
        %1284 = vdwg.mxu0
        %1285 = vmatprep.subr.mxu0 0.0
        %1286 = vmatpush1.msra.mxu0 0.0
        %1287 = vmatprep.subr.mxu0 0.0
        %1288 = vmatpush1.msra.mxu0 0.0
        %1289 = vmatprep.subr.mxu0 0.0
        %1290 = vmatpush1.msra.mxu0 0.0
        %1291 = vmatprep.subr.mxu0 0.0
        %1292 = vmatpush1.msra.mxu0 0.0
        %1293 = vmatprep.subr.mxu0 0.0
        %1294 = vmatpush1.msra.mxu0 0.0
        %1295 = vmatprep.subr.mxu0 0.0
        %1296 = vmatpush1.msra.mxu0 0.0
        %1297 = vmatprep.subr.mxu0 0.0
        %1298 = vmatpush1.msra.mxu0 0.0
        %1299 = vmatprep.subr.mxu0 0.0
        %1300 = vmatpush1.msra.mxu0 0.0
        %1301 = vmatprep.subr.mxu0 0.0
        %1302 = vmatpush1.msra.mxu0 0.0
        %1303 = vmatprep.subr.mxu0 0.0
        %1304 = vmatpush1.msra.mxu0 0.0
        %1305 = vmatprep.subr.mxu0 0.0
        %1306 = vmatpush1.msra.mxu0 0.0
        %1307 = vmatprep.subr.mxu0 0.0
        %1308 = vmatpush1.msra.mxu0 0.0
        %1309 = vmatprep.subr.mxu0 0.0
        %v1310 = vand.u32 %v868, 4294901760
        %1311 = vmatpush1.msra.mxu0 %v1310
        %1312 = vmatprep.subr.mxu0 0.0
        %v1313 = vand.u32 %v867, 4294901760
        %1314 = vmatpush1.msra.mxu0 %v1313
        %1315 = vmatprep.subr.mxu0 0.0
        %v1316 = vand.u32 %v866, 4294901760
        %1317 = vmatpush1.msra.mxu0 %v1316
        %1318 = vmatprep.subr.mxu0 0.0
        %v1319 = vand.u32 %v865, 4294901760
        %1320 = vmatpush1.msra.mxu0 %v1319
        %1321 = vmatprep.subr.mxu0 0.0
        %1322 = vmatpush2.msra.mxu0 0.0
        %1323 = vmatprep.subr.mxu0 0.0
        %1324 = vmatpush2.msra.mxu0 0.0
        %1325 = vmatprep.subr.mxu0 0.0
        %1326 = vmatpush2.msra.mxu0 0.0
        %1327 = vmatprep.subr.mxu0 0.0
        %1328 = vmatpush2.msra.mxu0 0.0
        %1329 = vmatprep.subr.mxu0 0.0
        %1330 = vmatpush2.msra.mxu0 0.0
        %1331 = vmatprep.subr.mxu0 0.0
        %1332 = vmatpush2.msra.mxu0 0.0
        %1333 = vmatprep.subr.mxu0 0.0
        %1334 = vmatpush2.msra.mxu0 0.0
        %1335 = vmatprep.subr.mxu0 0.0
        %1336 = vmatpush2.msra.mxu0 0.0
        %1337 = vmatprep.subr.mxu0 0.0
        %1338 = vmatpush2.msra.mxu0 0.0
        %1339 = vmatprep.subr.mxu0 0.0
        %1340 = vmatpush2.msra.mxu0 0.0
        %1341 = vmatprep.subr.mxu0 0.0
        %1342 = vmatpush2.msra.mxu0 0.0
        %1343 = vmatprep.subr.mxu0 0.0
        %1344 = vmatpush2.msra.mxu0 0.0
        %1345 = vmatprep.subr.mxu0 0.0
        %1346 = vmatpush2.msra.mxu0 0.0
        %1347 = vmatprep.subr.mxu0 0.0
        %1348 = vmatpush2.msra.mxu0 0.0
        %1349 = vmatprep.subr.mxu0 0.0
        %1350 = vmatpush2.msra.mxu0 0.0
        %1351 = vmatprep.subr.mxu0 0.0
        %1352 = vmatpush2.msra.mxu0 0.0
        %1353 = vmatprep.mubr.f32.mxu0 0.0
        %v1354 = vand.u32 %v873, 4294901760
        %1355 = vmatmul.mubr.f32.gmra.mxu0 %v1354
        %v1356 = vpop.f32.mrf.mxu0
        %v1357 = vadd.f32 %v1282, %v1356
        %v1358 = vpop.f32.mrf.mxu0
        %1359 = vdwg.mxu0
        %v1360 = vmax.f32 %v1357, 0.0
        %v1361 = vld [vmem:[%s3] sm:$0xff]
        %v1362 = vld [vmem:[%s3 + $0x8] sm:$0xff]
        %v1363 = vld [vmem:[%s3 + $0x10] sm:$0xff]
        %v1364 = vld [vmem:[%s3 + $0x18] sm:$0xff]
        %v1365 = vld [vmem:[%s4] sm:$0xff]
        %v1366 = vld [vmem:[%s4 + $0x8] sm:$0xff]
        %v1367 = vld [vmem:[%s4 + $0x10] sm:$0xff]
        %v1368 = vld [vmem:[%s4 + $0x18] sm:$0xff]
        %vm1369 = vcmask 15360
        %v1371 = vsel %vm1369, %v1361, 0
        %v1374 = vsel %vm1369, %v1362, 0
        %v1377 = vsel %vm1369, %v1363, 0
        %v1380 = vsel %vm1369, %v1364, 0
        %vm1382 = vcmask 1041408
        %v1384 = vsel %vm1382, %v1360, 0
        %1386 = vmatprep.subr.mxu0 0.0
        %1387 = vmatpush1.msra.mxu0 0.0
        %1388 = vmatprep.subr.mxu0 0.0
        %1389 = vmatpush1.msra.mxu0 0.0
        %1390 = vmatprep.subr.mxu0 0.0
        %1391 = vmatpush1.msra.mxu0 0.0
        %1392 = vmatprep.subr.mxu0 0.0
        %1393 = vmatpush1.msra.mxu0 0.0
        %1394 = vmatprep.subr.mxu0 0.0
        %1395 = vmatpush1.msra.mxu0 0.0
        %1396 = vmatprep.subr.mxu0 0.0
        %1397 = vmatpush1.msra.mxu0 0.0
        %1398 = vmatprep.subr.mxu0 0.0
        %1399 = vmatpush1.msra.mxu0 0.0
        %1400 = vmatprep.subr.mxu0 0.0
        %1401 = vmatpush1.msra.mxu0 0.0
        %1402 = vmatprep.subr.mxu0 0.0
        %1403 = vmatpush1.msra.mxu0 0.0
        %1404 = vmatprep.subr.mxu0 0.0
        %1405 = vmatpush1.msra.mxu0 0.0
        %1406 = vmatprep.subr.mxu0 0.0
        %1407 = vmatpush1.msra.mxu0 0.0
        %1408 = vmatprep.subr.mxu0 0.0
        %1409 = vmatpush1.msra.mxu0 0.0
        %1410 = vmatprep.subr.mxu0 0.0
        %1411 = vmatpush1.msra.mxu0 0.0
        %1412 = vmatprep.subr.mxu0 0.0
        %1413 = vmatpush1.msra.mxu0 0.0
        %1414 = vmatprep.subr.mxu0 0.0
        %1415 = vmatpush1.msra.mxu0 0.0
        %1416 = vmatprep.subr.mxu0 0.0
        %v1417 = vand.u32 %v1384, 4294901760
        %1418 = vmatpush1.msra.mxu0 %v1417
        %1419 = vmatprep.subr.mxu0 0.0
        %1420 = vmatpush2.msra.mxu0 0.0
        %1421 = vmatprep.subr.mxu0 0.0
        %1422 = vmatpush2.msra.mxu0 0.0
        %1423 = vmatprep.subr.mxu0 0.0
        %1424 = vmatpush2.msra.mxu0 0.0
        %1425 = vmatprep.subr.mxu0 0.0
        %1426 = vmatpush2.msra.mxu0 0.0
        %1427 = vmatprep.subr.mxu0 0.0
        %1428 = vmatpush2.msra.mxu0 0.0
        %1429 = vmatprep.subr.mxu0 0.0
        %1430 = vmatpush2.msra.mxu0 0.0
        %1431 = vmatprep.subr.mxu0 0.0
        %1432 = vmatpush2.msra.mxu0 0.0
        %1433 = vmatprep.subr.mxu0 0.0
        %1434 = vmatpush2.msra.mxu0 0.0
        %1435 = vmatprep.subr.mxu0 0.0
        %1436 = vmatpush2.msra.mxu0 0.0
        %1437 = vmatprep.subr.mxu0 0.0
        %1438 = vmatpush2.msra.mxu0 0.0
        %1439 = vmatprep.subr.mxu0 0.0
        %1440 = vmatpush2.msra.mxu0 0.0
        %1441 = vmatprep.subr.mxu0 0.0
        %1442 = vmatpush2.msra.mxu0 0.0
        %1443 = vmatprep.subr.mxu0 0.0
        %1444 = vmatpush2.msra.mxu0 0.0
        %1445 = vmatprep.subr.mxu0 0.0
        %1446 = vmatpush2.msra.mxu0 0.0
        %1447 = vmatprep.subr.mxu0 0.0
        %1448 = vmatpush2.msra.mxu0 0.0
        %1449 = vmatprep.subr.mxu0 0.0
        %1450 = vmatpush2.msra.mxu0 0.0
        %1451 = vmatprep.mubr.f32.mxu0 0.0
        %v1452 = vand.u32 %v1371, 4294901760
        %v1453 = vsub.f32 %v1371, %v1452
        %v1454 = vand.u32 %v1453, 4294901760
        %v1455 = vsub.f32 %v1453, %v1454
        %v1456 = vand.u32 %v1455, 4294901760
        %1457 = vmatmul.mubr.f32.gmra.mxu0 %v1456
        %v1458 = vpop.f32.mrf.mxu0
        %v1459 = vadd.f32 %v1365, %v1458
        %v1460 = vpop.f32.mrf.mxu0
        %1461 = vmatprep.mubr.f32.mxu0 0.0
        %v1462 = vand.u32 %v1374, 4294901760
        %v1463 = vsub.f32 %v1374, %v1462
        %v1464 = vand.u32 %v1463, 4294901760
        %v1465 = vsub.f32 %v1463, %v1464
        %v1466 = vand.u32 %v1465, 4294901760
        %1467 = vmatmul.mubr.f32.gmra.mxu0 %v1466
        %v1468 = vpop.f32.mrf.mxu0
        %v1469 = vadd.f32 %v1366, %v1468
        %v1470 = vpop.f32.mrf.mxu0
        %1471 = vmatprep.mubr.f32.mxu0 0.0
        %v1472 = vand.u32 %v1377, 4294901760
        %v1473 = vsub.f32 %v1377, %v1472
        %v1474 = vand.u32 %v1473, 4294901760
        %v1475 = vsub.f32 %v1473, %v1474
        %v1476 = vand.u32 %v1475, 4294901760
        %1477 = vmatmul.mubr.f32.gmra.mxu0 %v1476
        %v1478 = vpop.f32.mrf.mxu0
        %v1479 = vadd.f32 %v1367, %v1478
        %v1480 = vpop.f32.mrf.mxu0
        %1481 = vmatprep.mubr.f32.mxu0 0.0
        %v1482 = vand.u32 %v1380, 4294901760
        %v1483 = vsub.f32 %v1380, %v1482
        %v1484 = vand.u32 %v1483, 4294901760
        %v1485 = vsub.f32 %v1483, %v1484
        %v1486 = vand.u32 %v1485, 4294901760
        %1487 = vmatmul.mubr.f32.gmra.mxu0 %v1486
        %v1488 = vpop.f32.mrf.mxu0
        %v1489 = vadd.f32 %v1368, %v1488
        %v1490 = vpop.f32.mrf.mxu0
        %1491 = vdwg.mxu0
        %1492 = vmatprep.subr.mxu0 0.0
        %1493 = vmatpush1.msra.mxu0 0.0
        %1494 = vmatprep.subr.mxu0 0.0
        %1495 = vmatpush1.msra.mxu0 0.0
        %1496 = vmatprep.subr.mxu0 0.0
        %1497 = vmatpush1.msra.mxu0 0.0
        %1498 = vmatprep.subr.mxu0 0.0
        %1499 = vmatpush1.msra.mxu0 0.0
        %1500 = vmatprep.subr.mxu0 0.0
        %1501 = vmatpush1.msra.mxu0 0.0
        %1502 = vmatprep.subr.mxu0 0.0
        %1503 = vmatpush1.msra.mxu0 0.0
        %1504 = vmatprep.subr.mxu0 0.0
        %1505 = vmatpush1.msra.mxu0 0.0
        %1506 = vmatprep.subr.mxu0 0.0
        %1507 = vmatpush1.msra.mxu0 0.0
        %1508 = vmatprep.subr.mxu0 0.0
        %1509 = vmatpush1.msra.mxu0 0.0
        %1510 = vmatprep.subr.mxu0 0.0
        %1511 = vmatpush1.msra.mxu0 0.0
        %1512 = vmatprep.subr.mxu0 0.0
        %1513 = vmatpush1.msra.mxu0 0.0
        %1514 = vmatprep.subr.mxu0 0.0
        %1515 = vmatpush1.msra.mxu0 0.0
        %1516 = vmatprep.subr.mxu0 0.0
        %1517 = vmatpush1.msra.mxu0 0.0
        %1518 = vmatprep.subr.mxu0 0.0
        %1519 = vmatpush1.msra.mxu0 0.0
        %1520 = vmatprep.subr.mxu0 0.0
        %1521 = vmatpush1.msra.mxu0 0.0
        %1522 = vmatprep.subr.mxu0 0.0
        %v1523 = vand.u32 %v1384, 4294901760
        %v1524 = vsub.f32 %v1384, %v1523
        %v1525 = vand.u32 %v1524, 4294901760
        %v1526 = vsub.f32 %v1524, %v1525
        %v1527 = vand.u32 %v1526, 4294901760
        %1528 = vmatpush1.msra.mxu0 %v1527
        %1529 = vmatprep.subr.mxu0 0.0
        %1530 = vmatpush2.msra.mxu0 0.0
        %1531 = vmatprep.subr.mxu0 0.0
        %1532 = vmatpush2.msra.mxu0 0.0
        %1533 = vmatprep.subr.mxu0 0.0
        %1534 = vmatpush2.msra.mxu0 0.0
        %1535 = vmatprep.subr.mxu0 0.0
        %1536 = vmatpush2.msra.mxu0 0.0
        %1537 = vmatprep.subr.mxu0 0.0
        %1538 = vmatpush2.msra.mxu0 0.0
        %1539 = vmatprep.subr.mxu0 0.0
        %1540 = vmatpush2.msra.mxu0 0.0
        %1541 = vmatprep.subr.mxu0 0.0
        %1542 = vmatpush2.msra.mxu0 0.0
        %1543 = vmatprep.subr.mxu0 0.0
        %1544 = vmatpush2.msra.mxu0 0.0
        %1545 = vmatprep.subr.mxu0 0.0
        %1546 = vmatpush2.msra.mxu0 0.0
        %1547 = vmatprep.subr.mxu0 0.0
        %1548 = vmatpush2.msra.mxu0 0.0
        %1549 = vmatprep.subr.mxu0 0.0
        %1550 = vmatpush2.msra.mxu0 0.0
        %1551 = vmatprep.subr.mxu0 0.0
        %1552 = vmatpush2.msra.mxu0 0.0
        %1553 = vmatprep.subr.mxu0 0.0
        %1554 = vmatpush2.msra.mxu0 0.0
        %1555 = vmatprep.subr.mxu0 0.0
        %1556 = vmatpush2.msra.mxu0 0.0
        %1557 = vmatprep.subr.mxu0 0.0
        %1558 = vmatpush2.msra.mxu0 0.0
        %1559 = vmatprep.subr.mxu0 0.0
        %1560 = vmatpush2.msra.mxu0 0.0
        %1561 = vmatprep.mubr.f32.mxu0 0.0
        %v1562 = vand.u32 %v1371, 4294901760
        %1563 = vmatmul.mubr.f32.gmra.mxu0 %v1562
        %v1564 = vpop.f32.mrf.mxu0
        %v1565 = vadd.f32 %v1459, %v1564
        %v1566 = vpop.f32.mrf.mxu0
        %1567 = vmatprep.mubr.f32.mxu0 0.0
        %v1568 = vand.u32 %v1374, 4294901760
        %1569 = vmatmul.mubr.f32.gmra.mxu0 %v1568
        %v1570 = vpop.f32.mrf.mxu0
        %v1571 = vadd.f32 %v1469, %v1570
        %v1572 = vpop.f32.mrf.mxu0
        %1573 = vmatprep.mubr.f32.mxu0 0.0
        %v1574 = vand.u32 %v1377, 4294901760
        %1575 = vmatmul.mubr.f32.gmra.mxu0 %v1574
        %v1576 = vpop.f32.mrf.mxu0
        %v1577 = vadd.f32 %v1479, %v1576
        %v1578 = vpop.f32.mrf.mxu0
        %1579 = vmatprep.mubr.f32.mxu0 0.0
        %v1580 = vand.u32 %v1380, 4294901760
        %1581 = vmatmul.mubr.f32.gmra.mxu0 %v1580
        %v1582 = vpop.f32.mrf.mxu0
        %v1583 = vadd.f32 %v1489, %v1582
        %v1584 = vpop.f32.mrf.mxu0
        %1585 = vdwg.mxu0
        %1586 = vmatprep.subr.mxu0 0.0
        %1587 = vmatpush1.msra.mxu0 0.0
        %1588 = vmatprep.subr.mxu0 0.0
        %1589 = vmatpush1.msra.mxu0 0.0
        %1590 = vmatprep.subr.mxu0 0.0
        %1591 = vmatpush1.msra.mxu0 0.0
        %1592 = vmatprep.subr.mxu0 0.0
        %1593 = vmatpush1.msra.mxu0 0.0
        %1594 = vmatprep.subr.mxu0 0.0
        %1595 = vmatpush1.msra.mxu0 0.0
        %1596 = vmatprep.subr.mxu0 0.0
        %1597 = vmatpush1.msra.mxu0 0.0
        %1598 = vmatprep.subr.mxu0 0.0
        %1599 = vmatpush1.msra.mxu0 0.0
        %1600 = vmatprep.subr.mxu0 0.0
        %1601 = vmatpush1.msra.mxu0 0.0
        %1602 = vmatprep.subr.mxu0 0.0
        %1603 = vmatpush1.msra.mxu0 0.0
        %1604 = vmatprep.subr.mxu0 0.0
        %1605 = vmatpush1.msra.mxu0 0.0
        %1606 = vmatprep.subr.mxu0 0.0
        %1607 = vmatpush1.msra.mxu0 0.0
        %1608 = vmatprep.subr.mxu0 0.0
        %1609 = vmatpush1.msra.mxu0 0.0
        %1610 = vmatprep.subr.mxu0 0.0
        %1611 = vmatpush1.msra.mxu0 0.0
        %1612 = vmatprep.subr.mxu0 0.0
        %1613 = vmatpush1.msra.mxu0 0.0
        %1614 = vmatprep.subr.mxu0 0.0
        %1615 = vmatpush1.msra.mxu0 0.0
        %1616 = vmatprep.subr.mxu0 0.0
        %v1617 = vand.u32 %v1384, 4294901760
        %v1618 = vsub.f32 %v1384, %v1617
        %1619 = vmatpush1.msra.mxu0 %v1618
        %1620 = vmatprep.subr.mxu0 0.0
        %1621 = vmatpush2.msra.mxu0 0.0
        %1622 = vmatprep.subr.mxu0 0.0
        %1623 = vmatpush2.msra.mxu0 0.0
        %1624 = vmatprep.subr.mxu0 0.0
        %1625 = vmatpush2.msra.mxu0 0.0
        %1626 = vmatprep.subr.mxu0 0.0
        %1627 = vmatpush2.msra.mxu0 0.0
        %1628 = vmatprep.subr.mxu0 0.0
        %1629 = vmatpush2.msra.mxu0 0.0
        %1630 = vmatprep.subr.mxu0 0.0
        %1631 = vmatpush2.msra.mxu0 0.0
        %1632 = vmatprep.subr.mxu0 0.0
        %1633 = vmatpush2.msra.mxu0 0.0
        %1634 = vmatprep.subr.mxu0 0.0
        %1635 = vmatpush2.msra.mxu0 0.0
        %1636 = vmatprep.subr.mxu0 0.0
        %1637 = vmatpush2.msra.mxu0 0.0
        %1638 = vmatprep.subr.mxu0 0.0
        %1639 = vmatpush2.msra.mxu0 0.0
        %1640 = vmatprep.subr.mxu0 0.0
        %1641 = vmatpush2.msra.mxu0 0.0
        %1642 = vmatprep.subr.mxu0 0.0
        %1643 = vmatpush2.msra.mxu0 0.0
        %1644 = vmatprep.subr.mxu0 0.0
        %1645 = vmatpush2.msra.mxu0 0.0
        %1646 = vmatprep.subr.mxu0 0.0
        %1647 = vmatpush2.msra.mxu0 0.0
        %1648 = vmatprep.subr.mxu0 0.0
        %1649 = vmatpush2.msra.mxu0 0.0
        %1650 = vmatprep.subr.mxu0 0.0
        %1651 = vmatpush2.msra.mxu0 0.0
        %1652 = vmatprep.mubr.f32.mxu0 0.0
        %v1653 = vand.u32 %v1371, 4294901760
        %v1654 = vsub.f32 %v1371, %v1653
        %1655 = vmatmul.mubr.f32.gmra.mxu0 %v1654
        %v1656 = vpop.f32.mrf.mxu0
        %v1657 = vadd.f32 %v1565, %v1656
        %v1658 = vpop.f32.mrf.mxu0
        %1659 = vmatprep.mubr.f32.mxu0 0.0
        %v1660 = vand.u32 %v1374, 4294901760
        %v1661 = vsub.f32 %v1374, %v1660
        %1662 = vmatmul.mubr.f32.gmra.mxu0 %v1661
        %v1663 = vpop.f32.mrf.mxu0
        %v1664 = vadd.f32 %v1571, %v1663
        %v1665 = vpop.f32.mrf.mxu0
        %1666 = vmatprep.mubr.f32.mxu0 0.0
        %v1667 = vand.u32 %v1377, 4294901760
        %v1668 = vsub.f32 %v1377, %v1667
        %1669 = vmatmul.mubr.f32.gmra.mxu0 %v1668
        %v1670 = vpop.f32.mrf.mxu0
        %v1671 = vadd.f32 %v1577, %v1670
        %v1672 = vpop.f32.mrf.mxu0
        %1673 = vmatprep.mubr.f32.mxu0 0.0
        %v1674 = vand.u32 %v1380, 4294901760
        %v1675 = vsub.f32 %v1380, %v1674
        %1676 = vmatmul.mubr.f32.gmra.mxu0 %v1675
        %v1677 = vpop.f32.mrf.mxu0
        %v1678 = vadd.f32 %v1583, %v1677
        %v1679 = vpop.f32.mrf.mxu0
        %1680 = vdwg.mxu0
        %1681 = vmatprep.subr.mxu0 0.0
        %1682 = vmatpush1.msra.mxu0 0.0
        %1683 = vmatprep.subr.mxu0 0.0
        %1684 = vmatpush1.msra.mxu0 0.0
        %1685 = vmatprep.subr.mxu0 0.0
        %1686 = vmatpush1.msra.mxu0 0.0
        %1687 = vmatprep.subr.mxu0 0.0
        %1688 = vmatpush1.msra.mxu0 0.0
        %1689 = vmatprep.subr.mxu0 0.0
        %1690 = vmatpush1.msra.mxu0 0.0
        %1691 = vmatprep.subr.mxu0 0.0
        %1692 = vmatpush1.msra.mxu0 0.0
        %1693 = vmatprep.subr.mxu0 0.0
        %1694 = vmatpush1.msra.mxu0 0.0
        %1695 = vmatprep.subr.mxu0 0.0
        %1696 = vmatpush1.msra.mxu0 0.0
        %1697 = vmatprep.subr.mxu0 0.0
        %1698 = vmatpush1.msra.mxu0 0.0
        %1699 = vmatprep.subr.mxu0 0.0
        %1700 = vmatpush1.msra.mxu0 0.0
        %1701 = vmatprep.subr.mxu0 0.0
        %1702 = vmatpush1.msra.mxu0 0.0
        %1703 = vmatprep.subr.mxu0 0.0
        %1704 = vmatpush1.msra.mxu0 0.0
        %1705 = vmatprep.subr.mxu0 0.0
        %1706 = vmatpush1.msra.mxu0 0.0
        %1707 = vmatprep.subr.mxu0 0.0
        %1708 = vmatpush1.msra.mxu0 0.0
        %1709 = vmatprep.subr.mxu0 0.0
        %1710 = vmatpush1.msra.mxu0 0.0
        %1711 = vmatprep.subr.mxu0 0.0
        %v1712 = vand.u32 %v1384, 4294901760
        %1713 = vmatpush1.msra.mxu0 %v1712
        %1714 = vmatprep.subr.mxu0 0.0
        %1715 = vmatpush2.msra.mxu0 0.0
        %1716 = vmatprep.subr.mxu0 0.0
        %1717 = vmatpush2.msra.mxu0 0.0
        %1718 = vmatprep.subr.mxu0 0.0
        %1719 = vmatpush2.msra.mxu0 0.0
        %1720 = vmatprep.subr.mxu0 0.0
        %1721 = vmatpush2.msra.mxu0 0.0
        %1722 = vmatprep.subr.mxu0 0.0
        %1723 = vmatpush2.msra.mxu0 0.0
        %1724 = vmatprep.subr.mxu0 0.0
        %1725 = vmatpush2.msra.mxu0 0.0
        %1726 = vmatprep.subr.mxu0 0.0
        %1727 = vmatpush2.msra.mxu0 0.0
        %1728 = vmatprep.subr.mxu0 0.0
        %1729 = vmatpush2.msra.mxu0 0.0
        %1730 = vmatprep.subr.mxu0 0.0
        %1731 = vmatpush2.msra.mxu0 0.0
        %1732 = vmatprep.subr.mxu0 0.0
        %1733 = vmatpush2.msra.mxu0 0.0
        %1734 = vmatprep.subr.mxu0 0.0
        %1735 = vmatpush2.msra.mxu0 0.0
        %1736 = vmatprep.subr.mxu0 0.0
        %1737 = vmatpush2.msra.mxu0 0.0
        %1738 = vmatprep.subr.mxu0 0.0
        %1739 = vmatpush2.msra.mxu0 0.0
        %1740 = vmatprep.subr.mxu0 0.0
        %1741 = vmatpush2.msra.mxu0 0.0
        %1742 = vmatprep.subr.mxu0 0.0
        %1743 = vmatpush2.msra.mxu0 0.0
        %1744 = vmatprep.subr.mxu0 0.0
        %1745 = vmatpush2.msra.mxu0 0.0
        %1746 = vmatprep.mubr.f32.mxu0 0.0
        %v1747 = vand.u32 %v1371, 4294901760
        %v1748 = vsub.f32 %v1371, %v1747
        %v1749 = vand.u32 %v1748, 4294901760
        %1750 = vmatmul.mubr.f32.gmra.mxu0 %v1749
        %v1751 = vpop.f32.mrf.mxu0
        %v1752 = vadd.f32 %v1657, %v1751
        %v1753 = vpop.f32.mrf.mxu0
        %1754 = vmatprep.mubr.f32.mxu0 0.0
        %v1755 = vand.u32 %v1374, 4294901760
        %v1756 = vsub.f32 %v1374, %v1755
        %v1757 = vand.u32 %v1756, 4294901760
        %1758 = vmatmul.mubr.f32.gmra.mxu0 %v1757
        %v1759 = vpop.f32.mrf.mxu0
        %v1760 = vadd.f32 %v1664, %v1759
        %v1761 = vpop.f32.mrf.mxu0
        %1762 = vmatprep.mubr.f32.mxu0 0.0
        %v1763 = vand.u32 %v1377, 4294901760
        %v1764 = vsub.f32 %v1377, %v1763
        %v1765 = vand.u32 %v1764, 4294901760
        %1766 = vmatmul.mubr.f32.gmra.mxu0 %v1765
        %v1767 = vpop.f32.mrf.mxu0
        %v1768 = vadd.f32 %v1671, %v1767
        %v1769 = vpop.f32.mrf.mxu0
        %1770 = vmatprep.mubr.f32.mxu0 0.0
        %v1771 = vand.u32 %v1380, 4294901760
        %v1772 = vsub.f32 %v1380, %v1771
        %v1773 = vand.u32 %v1772, 4294901760
        %1774 = vmatmul.mubr.f32.gmra.mxu0 %v1773
        %v1775 = vpop.f32.mrf.mxu0
        %v1776 = vadd.f32 %v1678, %v1775
        %v1777 = vpop.f32.mrf.mxu0
        %1778 = vdwg.mxu0
        %1779 = vmatprep.subr.mxu0 0.0
        %1780 = vmatpush1.msra.mxu0 0.0
        %1781 = vmatprep.subr.mxu0 0.0
        %1782 = vmatpush1.msra.mxu0 0.0
        %1783 = vmatprep.subr.mxu0 0.0
        %1784 = vmatpush1.msra.mxu0 0.0
        %1785 = vmatprep.subr.mxu0 0.0
        %1786 = vmatpush1.msra.mxu0 0.0
        %1787 = vmatprep.subr.mxu0 0.0
        %1788 = vmatpush1.msra.mxu0 0.0
        %1789 = vmatprep.subr.mxu0 0.0
        %1790 = vmatpush1.msra.mxu0 0.0
        %1791 = vmatprep.subr.mxu0 0.0
        %1792 = vmatpush1.msra.mxu0 0.0
        %1793 = vmatprep.subr.mxu0 0.0
        %1794 = vmatpush1.msra.mxu0 0.0
        %1795 = vmatprep.subr.mxu0 0.0
        %1796 = vmatpush1.msra.mxu0 0.0
        %1797 = vmatprep.subr.mxu0 0.0
        %1798 = vmatpush1.msra.mxu0 0.0
        %1799 = vmatprep.subr.mxu0 0.0
        %1800 = vmatpush1.msra.mxu0 0.0
        %1801 = vmatprep.subr.mxu0 0.0
        %1802 = vmatpush1.msra.mxu0 0.0
        %1803 = vmatprep.subr.mxu0 0.0
        %1804 = vmatpush1.msra.mxu0 0.0
        %1805 = vmatprep.subr.mxu0 0.0
        %1806 = vmatpush1.msra.mxu0 0.0
        %1807 = vmatprep.subr.mxu0 0.0
        %1808 = vmatpush1.msra.mxu0 0.0
        %1809 = vmatprep.subr.mxu0 0.0
        %v1810 = vand.u32 %v1384, 4294901760
        %v1811 = vsub.f32 %v1384, %v1810
        %v1812 = vand.u32 %v1811, 4294901760
        %1813 = vmatpush1.msra.mxu0 %v1812
        %1814 = vmatprep.subr.mxu0 0.0
        %1815 = vmatpush2.msra.mxu0 0.0
        %1816 = vmatprep.subr.mxu0 0.0
        %1817 = vmatpush2.msra.mxu0 0.0
        %1818 = vmatprep.subr.mxu0 0.0
        %1819 = vmatpush2.msra.mxu0 0.0
        %1820 = vmatprep.subr.mxu0 0.0
        %1821 = vmatpush2.msra.mxu0 0.0
        %1822 = vmatprep.subr.mxu0 0.0
        %1823 = vmatpush2.msra.mxu0 0.0
        %1824 = vmatprep.subr.mxu0 0.0
        %1825 = vmatpush2.msra.mxu0 0.0
        %1826 = vmatprep.subr.mxu0 0.0
        %1827 = vmatpush2.msra.mxu0 0.0
        %1828 = vmatprep.subr.mxu0 0.0
        %1829 = vmatpush2.msra.mxu0 0.0
        %1830 = vmatprep.subr.mxu0 0.0
        %1831 = vmatpush2.msra.mxu0 0.0
        %1832 = vmatprep.subr.mxu0 0.0
        %1833 = vmatpush2.msra.mxu0 0.0
        %1834 = vmatprep.subr.mxu0 0.0
        %1835 = vmatpush2.msra.mxu0 0.0
        %1836 = vmatprep.subr.mxu0 0.0
        %1837 = vmatpush2.msra.mxu0 0.0
        %1838 = vmatprep.subr.mxu0 0.0
        %1839 = vmatpush2.msra.mxu0 0.0
        %1840 = vmatprep.subr.mxu0 0.0
        %1841 = vmatpush2.msra.mxu0 0.0
        %1842 = vmatprep.subr.mxu0 0.0
        %1843 = vmatpush2.msra.mxu0 0.0
        %1844 = vmatprep.subr.mxu0 0.0
        %1845 = vmatpush2.msra.mxu0 0.0
        %1846 = vmatprep.mubr.f32.mxu0 0.0
        %v1847 = vand.u32 %v1371, 4294901760
        %1848 = vmatmul.mubr.f32.gmra.mxu0 %v1847
        %v1849 = vpop.f32.mrf.mxu0
        %v1850 = vadd.f32 %v1752, %v1849
        %v1851 = vpop.f32.mrf.mxu0
        %1852 = vmatprep.mubr.f32.mxu0 0.0
        %v1853 = vand.u32 %v1374, 4294901760
        %1854 = vmatmul.mubr.f32.gmra.mxu0 %v1853
        %v1855 = vpop.f32.mrf.mxu0
        %v1856 = vadd.f32 %v1760, %v1855
        %v1857 = vpop.f32.mrf.mxu0
        %1858 = vmatprep.mubr.f32.mxu0 0.0
        %v1859 = vand.u32 %v1377, 4294901760
        %1860 = vmatmul.mubr.f32.gmra.mxu0 %v1859
        %v1861 = vpop.f32.mrf.mxu0
        %v1862 = vadd.f32 %v1768, %v1861
        %v1863 = vpop.f32.mrf.mxu0
        %1864 = vmatprep.mubr.f32.mxu0 0.0
        %v1865 = vand.u32 %v1380, 4294901760
        %1866 = vmatmul.mubr.f32.gmra.mxu0 %v1865
        %v1867 = vpop.f32.mrf.mxu0
        %v1868 = vadd.f32 %v1776, %v1867
        %v1869 = vpop.f32.mrf.mxu0
        %1870 = vdwg.mxu0
        %1871 = vmatprep.subr.mxu0 0.0
        %1872 = vmatpush1.msra.mxu0 0.0
        %1873 = vmatprep.subr.mxu0 0.0
        %1874 = vmatpush1.msra.mxu0 0.0
        %1875 = vmatprep.subr.mxu0 0.0
        %1876 = vmatpush1.msra.mxu0 0.0
        %1877 = vmatprep.subr.mxu0 0.0
        %1878 = vmatpush1.msra.mxu0 0.0
        %1879 = vmatprep.subr.mxu0 0.0
        %1880 = vmatpush1.msra.mxu0 0.0
        %1881 = vmatprep.subr.mxu0 0.0
        %1882 = vmatpush1.msra.mxu0 0.0
        %1883 = vmatprep.subr.mxu0 0.0
        %1884 = vmatpush1.msra.mxu0 0.0
        %1885 = vmatprep.subr.mxu0 0.0
        %1886 = vmatpush1.msra.mxu0 0.0
        %1887 = vmatprep.subr.mxu0 0.0
        %1888 = vmatpush1.msra.mxu0 0.0
        %1889 = vmatprep.subr.mxu0 0.0
        %1890 = vmatpush1.msra.mxu0 0.0
        %1891 = vmatprep.subr.mxu0 0.0
        %1892 = vmatpush1.msra.mxu0 0.0
        %1893 = vmatprep.subr.mxu0 0.0
        %1894 = vmatpush1.msra.mxu0 0.0
        %1895 = vmatprep.subr.mxu0 0.0
        %1896 = vmatpush1.msra.mxu0 0.0
        %1897 = vmatprep.subr.mxu0 0.0
        %1898 = vmatpush1.msra.mxu0 0.0
        %1899 = vmatprep.subr.mxu0 0.0
        %1900 = vmatpush1.msra.mxu0 0.0
        %1901 = vmatprep.subr.mxu0 0.0
        %v1902 = vand.u32 %v1384, 4294901760
        %1903 = vmatpush1.msra.mxu0 %v1902
        %1904 = vmatprep.subr.mxu0 0.0
        %1905 = vmatpush2.msra.mxu0 0.0
        %1906 = vmatprep.subr.mxu0 0.0
        %1907 = vmatpush2.msra.mxu0 0.0
        %1908 = vmatprep.subr.mxu0 0.0
        %1909 = vmatpush2.msra.mxu0 0.0
        %1910 = vmatprep.subr.mxu0 0.0
        %1911 = vmatpush2.msra.mxu0 0.0
        %1912 = vmatprep.subr.mxu0 0.0
        %1913 = vmatpush2.msra.mxu0 0.0
        %1914 = vmatprep.subr.mxu0 0.0
        %1915 = vmatpush2.msra.mxu0 0.0
        %1916 = vmatprep.subr.mxu0 0.0
        %1917 = vmatpush2.msra.mxu0 0.0
        %1918 = vmatprep.subr.mxu0 0.0
        %1919 = vmatpush2.msra.mxu0 0.0
        %1920 = vmatprep.subr.mxu0 0.0
        %1921 = vmatpush2.msra.mxu0 0.0
        %1922 = vmatprep.subr.mxu0 0.0
        %1923 = vmatpush2.msra.mxu0 0.0
        %1924 = vmatprep.subr.mxu0 0.0
        %1925 = vmatpush2.msra.mxu0 0.0
        %1926 = vmatprep.subr.mxu0 0.0
        %1927 = vmatpush2.msra.mxu0 0.0
        %1928 = vmatprep.subr.mxu0 0.0
        %1929 = vmatpush2.msra.mxu0 0.0
        %1930 = vmatprep.subr.mxu0 0.0
        %1931 = vmatpush2.msra.mxu0 0.0
        %1932 = vmatprep.subr.mxu0 0.0
        %1933 = vmatpush2.msra.mxu0 0.0
        %1934 = vmatprep.subr.mxu0 0.0
        %1935 = vmatpush2.msra.mxu0 0.0
        %1936 = vmatprep.mubr.f32.mxu0 0.0
        %v1937 = vand.u32 %v1371, 4294901760
        %1938 = vmatmul.mubr.f32.gmra.mxu0 %v1937
        %v1939 = vpop.f32.mrf.mxu0
        %v1940 = vadd.f32 %v1850, %v1939
        %v1941 = vpop.f32.mrf.mxu0
        %1942 = vmatprep.mubr.f32.mxu0 0.0
        %v1943 = vand.u32 %v1374, 4294901760
        %1944 = vmatmul.mubr.f32.gmra.mxu0 %v1943
        %v1945 = vpop.f32.mrf.mxu0
        %v1946 = vadd.f32 %v1856, %v1945
        %v1947 = vpop.f32.mrf.mxu0
        %1948 = vmatprep.mubr.f32.mxu0 0.0
        %v1949 = vand.u32 %v1377, 4294901760
        %1950 = vmatmul.mubr.f32.gmra.mxu0 %v1949
        %v1951 = vpop.f32.mrf.mxu0
        %v1952 = vadd.f32 %v1862, %v1951
        %v1953 = vpop.f32.mrf.mxu0
        %1954 = vmatprep.mubr.f32.mxu0 0.0
        %v1955 = vand.u32 %v1380, 4294901760
        %1956 = vmatmul.mubr.f32.gmra.mxu0 %v1955
        %v1957 = vpop.f32.mrf.mxu0
        %v1958 = vadd.f32 %v1868, %v1957
        %v1959 = vpop.f32.mrf.mxu0
        %1960 = vdwg.mxu0
        %v1961 = vxor.u32 %v1940, 2147483648
        %v1962 = vxor.u32 %v1946, 2147483648
        %v1963 = vxor.u32 %v1952, 2147483648
        %v1964 = vxor.u32 %v1958, 2147483648
        %v1965 = vmul.f32 %v1961, 1.442695
        %v1966 = vpow.pop %v1965
        %v1967 = vmul.f32 %v1962, 1.442695
        %v1968 = vpow.pop %v1967
        %v1969 = vmul.f32 %v1963, 1.442695
        %v1970 = vpow.pop %v1969
        %v1971 = vmul.f32 %v1964, 1.442695
        %v1972 = vpow.pop %v1971
        %v1973 = vadd.f32 %v1966, 1.0
        %v1974 = vadd.f32 %v1968, 1.0
        %v1975 = vadd.f32 %v1970, 1.0
        %v1976 = vadd.f32 %v1972, 1.0
        %v1977 = vrcp.pop %v1973
        %v1978 = vmul.f32 1.0, %v1977
        %v1979 = vrcp.pop %v1974
        %v1980 = vmul.f32 1.0, %v1979
        %v1981 = vrcp.pop %v1975
        %v1982 = vmul.f32 1.0, %v1981
        %v1983 = vrcp.pop %v1976
        %v1984 = vmul.f32 1.0, %v1983
        %1986 = vset.pattern.permute.xlu0 0
        %1987 = vperm.xlu0 %1986, %v1978
        %v1988 = vpop.permute.xlu0 %1987
        %1991 = vset.pattern.permute.xlu0 0
        %1992 = vperm.xlu0 %1991, %v1980
        %v1993 = vpop.permute.xlu0 %1992
        %1996 = vset.pattern.permute.xlu0 0
        %1997 = vperm.xlu0 %1996, %v1982
        %v1998 = vpop.permute.xlu0 %1997
        %2001 = vset.pattern.permute.xlu0 0
        %2002 = vperm.xlu0 %2001, %v1984
        %v2003 = vpop.permute.xlu0 %2002
        %v2005 = vmul.f32 %v243, %v1988
        %v2006 = vmul.f32 %v244, %v1988
        %v2007 = vmul.f32 %v245, %v1993
        %v2008 = vmul.f32 %v246, %v1993
        %v2009 = vmul.f32 %v247, %v1998
        %v2010 = vmul.f32 %v248, %v1998
        %v2011 = vmul.f32 %v249, %v2003
        %v2012 = vmul.f32 %v250, %v2003
        %2013 = vst [vmem:[%s242] sm:$0xff] %v2005
        %2014 = vst [vmem:[%s242 + $0x8] sm:$0xff] %v2006
        %2015 = vst [vmem:[%s242 + $0x10] sm:$0xff] %v2007
        %2016 = vst [vmem:[%s242 + $0x18] sm:$0xff] %v2008
        %2017 = vst [vmem:[%s242 + $0x20] sm:$0xff] %v2009
        %2018 = vst [vmem:[%s242 + $0x28] sm:$0xff] %v2010
        %2019 = vst [vmem:[%s242 + $0x30] sm:$0xff] %v2011
        %2020 = vst [vmem:[%s242 + $0x38] sm:$0xff] %v2012
        %s2021 = sand.u32 %s140, 1
        %s2022 = scalar_lea.sflag [#allocation4], %s2021
        %s2023 = sand.u32 %s140, 1
        %s2024 = smul.addr %s2023, 64
        %s2025 = scalar_lea.vmem [#allocation5], %s2024
        // Predicated region
        $region45: #{tpu_custom_call.1} parent=39 // pred_check
          %p2026 = pneg %p150
        $region46: #{tpu_custom_call.1} parent=39 // pred_check_branch
          %2028 = sbr.rel (%p2026) target = $region48
        $region47: #{tpu_custom_call.1} parent=39 // pred_region
          %s2030 = ssub.s32 1024, 1024
          %2031 = vsyncadd %s2022, %s2030
          %s2032 = smul.addr %s22, 8
          %s2033 = smul.addr %s2032, 128
          %s2034 = scalar_lea.hbm %s5, %s2033
          %s2035 = sshll.u32 %s2025, 4
          %s2036 = int_to_ptr.vmem [resolvable:$true] %s2035
          %2041 = dma.vmem_to_hbm [thread:$0]  %s2036, 1024, %s2034, %s2022, 256, 256, 16
        $region48: #{tpu_custom_call.1} parent=39 // pred_fallthru
          _
      $region40: #{tpu_custom_call.1} parent=5 // pred_fallthru
        _
      %p2042 = scmp.le.s32.totalorder 2, %s17
      // Predicated region
      $region49: #{tpu_custom_call.1} parent=5 // pred_check
        %p2043 = pneg %p2042
      $region50: #{tpu_custom_call.1} parent=5 // pred_check_branch
        %2045 = sbr.rel (%p2043) target = $region52
      $region51: #{tpu_custom_call.1} parent=5 // pred_region
        %s2046 = ssub.s32 %s17, 2
        // Predicated region
        $region53: #{tpu_custom_call.1} parent=51 // pred_check
          %p2047 = pneg %p156
        $region54: #{tpu_custom_call.1} parent=51 // pred_check_branch
          %2049 = sbr.rel (%p2047) target = $region56
        $region55: #{tpu_custom_call.1} parent=51 // pred_region
          %s2050 = sand.u32 %s141, 1
          %s2051 = scalar_lea.sflag [#allocation4], %s2050
          %s2052 = sand.u32 %s141, 1
          %s2053 = smul.addr %s2052, 64
          %s2054 = scalar_lea.vmem [#allocation5], %s2053
          %2055 = dma.done %s2051, 1024
        $region56: #{tpu_custom_call.1} parent=51 // pred_fallthru
          _
      $region52: #{tpu_custom_call.1} parent=5 // pred_fallthru
        _
    $region6: #{tpu_custom_call.1} parent=1 // loop_footer
      %s21 = sadd.s32 1, %s17
    $region7: #{tpu_custom_call.1} parent=1 // loop_footer_branch
      %16 = sbr.rel target = $region3
    $region8: #{tpu_custom_call.1} parent=1 // loop_exit
      _
    %2056 = vsyncpa [#allocation3], 1
    %s2057 = scalar_lea.sflag [#allocation3], 1
    %2058 = vsyncpa %s2057, 1
    %2059 = vsyncpa [#allocation4], 1
    %s2060 = scalar_lea.sflag [#allocation4], 1
    %2061 = vsyncpa %s2060, 1

</llo_original>
